<compile_context>
chip_gen: v7x
topology: tpu7x:2x2x1
jax: 0.10.0
libtpu: 0.0.40
codegen_flags: <defaults>
</compile_context>

<pallas_src>
import jax
import jax.numpy as jnp
from jax.experimental import pallas as pl
from jax.experimental.pallas import tpu as pltpu

# ---------------- model hyperparameters (match the nn.Module defaults) -------
WORD_EMB = 300
TAG_NUM, TAG_EMB = 51, 20
POS_NUM, POS_EMB = 4, 20
DIR_NUM, DIR_EMB = 3, 5
EDGE_NUM, EDGE_EMB = 46, 20
TOKEN_EMB = 500
DEP_EMB = 200
C1_OUT = C2_OUT = C3_OUT = 16
L1, L2, L3 = 2, 3, 4
L_MAX = max(L1, L2, L3)                       # 4 taps after zero-padding
N_FUSED = C1_OUT + C2_OUT + C3_OUT            # 48 fused conv channels
CONV_WIDTH = TOKEN_EMB * 2 + DEP_EMB          # 1200
WT_IN = WORD_EMB + TAG_EMB                    # 320 (word + tag part)
TOKEN_IN = WT_IN + POS_EMB                    # 340
DEP_IN = DIR_EMB + EDGE_EMB                   # 25
N_CLASSES = 2
VOCAB = 100                                   # synthetic w2v vocabulary size


# ---------------------------------- kernel -----------------------------------
def _model_kernel(wt_ref, pos_ref, dep_ref,
                  wp_ref, wtok_wt_ref, wtok_pe_ref, wdep_ref,
                  wc_t1_ref, wc_d_ref, wc_t2_ref, wdense_ref,
                  out_ref):
    _, Bt, S, _ = wt_ref.shape
    n = Bt * S
    bf16 = jnp.bfloat16

    # ---- joint token projection for BOTH entities (one MXU pass, M = 2n) ---
    # split matmul (wt@W_a + relu(pos@Wp)@W_b) avoids any lane-dim concats.
    pe = jnp.dot(pos_ref[...].reshape(2 * n, POS_NUM), wp_ref[...],
                 preferred_element_type=jnp.float32)
    pe = jnp.maximum(pe, 0.0)                                        # ReLU
    tok = jnp.dot(wt_ref[...].reshape(2 * n, WT_IN), wtok_wt_ref[...],
                  preferred_element_type=jnp.float32)
    tok = tok + jnp.dot(pe.astype(bf16), wtok_pe_ref[...],
                        preferred_element_type=jnp.float32)          # (2n, 500)
    t1 = tok[:n].astype(bf16)                                        # (n, 500)
    t2 = tok[n:].astype(bf16)                                        # (n, 500)

    d = jnp.dot(dep_ref[...].reshape(n, DEP_IN), wdep_ref[...],
                preferred_element_type=jnp.float32).astype(bf16)     # (n, 200)

    # ---- fused convs: taps packed on the MXU N axis (3 matmuls, N = 192) ---
    # y[i, l*48 + c] = tap-l contribution of conv channel c at row i.
    y = jnp.dot(t1, wc_t1_ref[...], preferred_element_type=jnp.float32)
    y = y + jnp.dot(d, wc_d_ref[...], preferred_element_type=jnp.float32)
    y = y + jnp.dot(t2, wc_t2_ref[...], preferred_element_type=jnp.float32)

    # ---- tap alignment: acc[i] = sum_l y[i+l, tap l slab] -------------------
    # roll rows up by l (XLU sublane rotate, free slot).  Rows that wrap
    # across batch/sequence boundaries land only on positions that are
    # invalid for the corresponding branch (or hit zero-padded tap weights)
    # and get masked below.
    acc = y[:, :N_FUSED]
    for l in range(1, L_MAX):                 # static unroll over 3 taps
        acc = acc + pltpu.roll(y[:, l * N_FUSED:(l + 1) * N_FUSED],
                               shift=n - l, axis=0)
    acc = jnp.maximum(acc, 0.0).reshape(Bt, S, N_FUSED)              # ReLU

    # ---- per-branch valid-window mask + max over sequence -------------------
    pos_i = jax.lax.broadcasted_iota(jnp.int32, (Bt, S, N_FUSED), 1)
    ch = jax.lax.broadcasted_iota(jnp.int32, (Bt, S, N_FUSED), 2)
    branch_len = jnp.where(ch < C1_OUT, L1,
                           jnp.where(ch < C1_OUT + C2_OUT, L2, L3))
    valid = pos_i <= (S - branch_len)          # t in [0, S - L] is valid
    # post-ReLU values are >= 0, so masking invalid positions to 0 leaves the
    # max over valid positions unchanged (matches torch.max over T = S-L+1).
    feats = jnp.max(jnp.where(valid, acc, 0.0), axis=1)              # (Bt, 48)

    # ---- dense_to_tag + softmax ---------------------------------------------
    logits = jnp.dot(feats.astype(bf16), wdense_ref[...],
                     preferred_element_type=jnp.float32)             # (Bt, 2)
    m = jnp.max(logits, axis=1, keepdims=True)
    e = jnp.exp(logits - m)
    out_ref[...] = e / jnp.sum(e, axis=1, keepdims=True)


# ------------------------------ host-side glue --------------------------------
def _fuse_conv_weights(wc1, wc2, wc3):
    """Zero-pad taps to L_MAX, fuse output channels, pack taps onto the N axis,
    then split along the conv width into the t1 / dep / t2 streams."""
    def pad_taps(wc):
        L = wc.shape[0]
        if L < L_MAX:
            wc = jnp.concatenate(
                [wc, jnp.zeros((L_MAX - L,) + wc.shape[1:], wc.dtype)], axis=0)
        return wc

    wcat = jnp.concatenate([pad_taps(wc1), pad_taps(wc2), pad_taps(wc3)],
                           axis=2)                               # (4, 1200, 48)
    # W[k, l*48 + c] = wcat[l, k, c]  -> lane-dense N = 192 conv matmuls
    wfn = jnp.transpose(wcat, (1, 0, 2)).reshape(CONV_WIDTH, L_MAX * N_FUSED)
    wct1 = wfn[:TOKEN_EMB]                                       # (500, 192)
    wcd = wfn[TOKEN_EMB:TOKEN_EMB + DEP_EMB]                     # (200, 192)
    wct2 = wfn[TOKEN_EMB + DEP_EMB:]                             # (500, 192)
    return wct1, wcd, wct2


def run_model(x, params):
    """x: (B, S, 14) float32 with integer-valued id columns (0,1,6,7,8,9)."""
    B, S, _ = x.shape
    (we, tag_e, dir_e, edge_e, wp, wtok, wdep, wc1, wc2, wc3, wdense) = params

    bf16 = jnp.bfloat16

    # ----- embedding gathers (plain JAX, fused under the caller's jit) ------
    def emb(table, ids):
        return jnp.take(table, ids.astype(jnp.int32), axis=0)

    w1 = emb(we, x[:, :, 0])                  # (B, S, 300)
    tg1 = emb(tag_e, x[:, :, 1])              # (B, S, 20)
    dire = emb(dir_e, x[:, :, 6])             # (B, S, 5)
    edge = emb(edge_e, x[:, :, 7])            # (B, S, 20)
    w2 = emb(we, x[:, :, 8])                  # (B, S, 300)
    tg2 = emb(tag_e, x[:, :, 9])              # (B, S, 20)

    # both entities stacked along a leading "pair" axis -> one joint matmul
    wt_pair = jnp.stack([jnp.concatenate([w1, tg1], axis=2),
                         jnp.concatenate([w2, tg2], axis=2)],
                        axis=0).astype(bf16)                     # (2, B, S, 320)
    pos_pair = jnp.stack([x[:, :, 2:6], x[:, :, 10:14]],
                         axis=0).astype(bf16)                    # (2, B, S, 4)
    dep_raw = jnp.concatenate([dire, edge], axis=2).astype(bf16)  # (B, S, 25)

    # ----- weight prep: split / fuse / cast to bf16 (MXU-native) ------------
    wp_b = wp.astype(bf16)                                       # (4, 20)
    wtok_wt = wtok[:WT_IN].astype(bf16)                          # (320, 500)
    wtok_pe = wtok[WT_IN:].astype(bf16)                          # (20, 500)
    wdep_b = wdep.astype(bf16)                                   # (25, 200)
    wct1, wcd, wct2 = _fuse_conv_weights(wc1, wc2, wc3)
    wct1, wcd, wct2 = wct1.astype(bf16), wcd.astype(bf16), wct2.astype(bf16)
    wdense_b = wdense.astype(bf16)                               # (48, 2)

    # ----- batch grid --------------------------------------------------------
    B_TILE = B if B <= 8 else 8
    assert B % B_TILE == 0, "demo assumes batch divisible by B_TILE"
    grid = (B // B_TILE,)

    def w_spec(w):
        return pl.BlockSpec(w.shape, lambda b, _nd=w.ndim: (0,) * _nd)

    out = pl.pallas_call(
        _model_kernel,
        out_shape=jax.ShapeDtypeStruct((B, N_CLASSES), jnp.float32),
        grid=grid,
        in_specs=[pl.BlockSpec((2, B_TILE, S, WT_IN), lambda b: (0, b, 0, 0)),
                  pl.BlockSpec((2, B_TILE, S, POS_NUM), lambda b: (0, b, 0, 0)),
                  pl.BlockSpec((B_TILE, S, DEP_IN), lambda b: (b, 0, 0)),
                  w_spec(wp_b), w_spec(wtok_wt), w_spec(wtok_pe), w_spec(wdep_b),
                  w_spec(wct1), w_spec(wcd), w_spec(wct2), w_spec(wdense_b)],
        out_specs=pl.BlockSpec((B_TILE, N_CLASSES), lambda b: (b, 0)),
        compiler_params=pltpu.CompilerParams(
            dimension_semantics=("parallel",)),
    )(wt_pair, pos_pair, dep_raw,
      wp_b, wtok_wt, wtok_pe, wdep_b, wct1, wcd, wct2, wdense_b)
    return out


# -------------------- pure-JAX f32 reference (torch semantics) ----------------
def ref_model(x, params):
    (we, tag_e, dir_e, edge_e, wp, wtok, wdep, wc1, wc2, wc3, wdense) = params
    ids = lambda c: x[:, :, c].astype(jnp.int32)

    w1, tg1 = we[ids(0)], tag_e[ids(1)]
    pe1 = jax.nn.relu(x[:, :, 2:6] @ wp)
    dire, edge = dir_e[ids(6)], edge_e[ids(7)]
    w2, tg2 = we[ids(8)], tag_e[ids(9)]
    pe2 = jax.nn.relu(x[:, :, 10:14] @ wp)

    tok1 = jnp.concatenate([w1, tg1, pe1], axis=2) @ wtok
    tok2 = jnp.concatenate([w2, tg2, pe2], axis=2) @ wtok
    dep = jnp.concatenate([dire, edge], axis=2) @ wdep
    feat = jnp.concatenate([tok1, dep, tok2], axis=2)            # (B, S, 1200)
    S = feat.shape[1]

    def conv_branch(wc):                                         # wc: (L, 1200, C)
        L = wc.shape[0]
        y = sum(feat[:, l:S - L + 1 + l, :] @ wc[l] for l in range(L))
        return jnp.max(jax.nn.relu(y), axis=1)                   # (B, C)

    f = jnp.concatenate([conv_branch(wc1), conv_branch(wc2), conv_branch(wc3)],
                        axis=1)                                  # (B, 48)
    return jax.nn.softmax(f @ wdense, axis=1)


def init_params(key):
    ks = jax.random.split(key, 11)
    scale = 0.05

    def rnd(k, shape):
        return (scale * jax.random.normal(k, shape)).astype(jnp.float32)

    we = rnd(ks[0], (VOCAB, WORD_EMB))
    # padding_idx=0 => row 0 is zeros at init
    tag_e = rnd(ks[1], (TAG_NUM, TAG_EMB)).at[0].set(0.0)
    dir_e = rnd(ks[2], (DIR_NUM, DIR_EMB)).at[0].set(0.0)
    edge_e = rnd(ks[3], (EDGE_NUM, EDGE_EMB)).at[0].set(0.0)
    # Linear layers stored as (in, out) so kernel does x @ W
    wp = rnd(ks[4], (POS_NUM, POS_EMB))
    wtok = rnd(ks[5], (TOKEN_IN, TOKEN_EMB))
    wdep = rnd(ks[6], (DEP_IN, DEP_EMB))
    # Conv weights stored as (L, width, out_ch)
    wc1 = rnd(ks[7], (L1, CONV_WIDTH, C1_OUT))
    wc2 = rnd(ks[8], (L2, CONV_WIDTH, C2_OUT))
    wc3 = rnd(ks[9], (L3, CONV_WIDTH, C3_OUT))
    wdense = rnd(ks[10], (N_FUSED, N_CLASSES))
    return (we, tag_e, dir_e, edge_e, wp, wtok, wdep, wc1, wc2, wc3, wdense)


if __name__ == "__main__":
    key = jax.random.PRNGKey(0)
    kp, kx1, kx2, kx3, kx4, kx5, kx6, kx7, kx8 = jax.random.split(key, 9)

    params = init_params(kp)

    B, S = 2, 8
    # integer-valued id columns stored as float (mirrors the .long() casts)
    word1 = jax.random.randint(kx1, (B, S), 0, VOCAB)
    tag1 = jax.random.randint(kx2, (B, S), 0, TAG_NUM)
    direc = jax.random.randint(kx3, (B, S), 0, DIR_NUM)
    edgei = jax.random.randint(kx4, (B, S), 0, EDGE_NUM)
    word2 = jax.random.randint(kx5, (B, S), 0, VOCAB)
    tag2 = jax.random.randint(kx6, (B, S), 0, TAG_NUM)
    posf1 = jax.random.normal(kx7, (B, S, 4))
    posf2 = jax.random.normal(kx8, (B, S, 4))

    x = jnp.concatenate([
        word1[..., None].astype(jnp.float32),
        tag1[..., None].astype(jnp.float32),
        posf1.astype(jnp.float32),
        direc[..., None].astype(jnp.float32),
        edgei[..., None].astype(jnp.float32),
        word2[..., None].astype(jnp.float32),
        tag2[..., None].astype(jnp.float32),
        posf2.astype(jnp.float32),
    ], axis=2)                                   # (B, S, 14)

    out = jax.jit(run_model)(x, params)
    out = jax.block_until_ready(out)

    assert out.shape == (B, N_CLASSES)
    assert bool(jnp.all(jnp.abs(jnp.sum(out, axis=1) - 1.0) < 1e-4))

    # numerics check against a pure-JAX f32 reference (bf16 MXU tolerance)
    ref = jax.jit(ref_model)(x, params)
    max_err = float(jnp.max(jnp.abs(out - ref)))
    assert max_err < 2e-2, f"max abs err vs reference: {max_err}"

    print("KERNEL_OK")
</pallas_src>

<mosaic_0001>
module attributes {stable_mosaic.version = 11 : i64} {
  func.func @_model_kernel(%arg0: i32, %arg1: memref<2x2x8x320xbf16, #tpu.memory_space<vmem>>, %arg2: memref<2x2x8x4xbf16, #tpu.memory_space<vmem>>, %arg3: memref<2x8x25xbf16, #tpu.memory_space<vmem>>, %arg4: memref<4x20xbf16, #tpu.memory_space<vmem>>, %arg5: memref<320x500xbf16, #tpu.memory_space<vmem>>, %arg6: memref<20x500xbf16, #tpu.memory_space<vmem>>, %arg7: memref<25x200xbf16, #tpu.memory_space<vmem>>, %arg8: memref<500x192xbf16, #tpu.memory_space<vmem>>, %arg9: memref<200x192xbf16, #tpu.memory_space<vmem>>, %arg10: memref<500x192xbf16, #tpu.memory_space<vmem>>, %arg11: memref<48x2xbf16, #tpu.memory_space<vmem>>, %arg12: memref<2x2xf32, #tpu.memory_space<vmem>>) attributes {dimension_semantics = [#tpu.dimension_semantics<parallel>], iteration_bounds = array<i64: 1>, scalar_prefetch = 0 : i64, scratch_operands = 0 : i64, tpu.core_type = #tpu.core_type<tc>, window_params = [{transform_indices = @transform_0, window_bounds = array<i64: 2, 2, 8, 320>}, {transform_indices = @transform_1, window_bounds = array<i64: 2, 2, 8, 4>}, {transform_indices = @transform_2, window_bounds = array<i64: 2, 8, 25>}, {pipeline_mode = #tpu.pipeline_mode<synchronous>, transform_indices = @transform_3, window_bounds = array<i64: 4, 20>}, {pipeline_mode = #tpu.pipeline_mode<synchronous>, transform_indices = @transform_4, window_bounds = array<i64: 320, 500>}, {pipeline_mode = #tpu.pipeline_mode<synchronous>, transform_indices = @transform_5, window_bounds = array<i64: 20, 500>}, {pipeline_mode = #tpu.pipeline_mode<synchronous>, transform_indices = @transform_6, window_bounds = array<i64: 25, 200>}, {pipeline_mode = #tpu.pipeline_mode<synchronous>, transform_indices = @transform_7, window_bounds = array<i64: 500, 192>}, {pipeline_mode = #tpu.pipeline_mode<synchronous>, transform_indices = @transform_8, window_bounds = array<i64: 200, 192>}, {pipeline_mode = #tpu.pipeline_mode<synchronous>, transform_indices = @transform_9, window_bounds = array<i64: 500, 192>}, {pipeline_mode = #tpu.pipeline_mode<synchronous>, transform_indices = @transform_10, window_bounds = array<i64: 48, 2>}, {transform_indices = @transform_11, window_bounds = array<i64: 2, 2>}]} {
    %c0 = arith.constant 0 : index
    %c0_0 = arith.constant 0 : index
    %c0_1 = arith.constant 0 : index
    %c0_2 = arith.constant 0 : index
    %0 = vector.load %arg2[%c0, %c0_0, %c0_1, %c0_2] : memref<2x2x8x4xbf16, #tpu.memory_space<vmem>>, vector<2x2x8x4xbf16>
    %1 = vector.shape_cast %0 : vector<2x2x8x4xbf16> to vector<32x4xbf16>
    %c0_3 = arith.constant 0 : index
    %c0_4 = arith.constant 0 : index
    %2 = vector.load %arg4[%c0_3, %c0_4] : memref<4x20xbf16, #tpu.memory_space<vmem>>, vector<4x20xbf16>
    %cst = arith.constant dense<0.000000e+00> : vector<32x20xf32>
    %3 = tpu.matmul %1, %2, %cst {dimension_numbers = #tpu.dot_dimension_numbers<[1], [0], [0], [1], [0, 0, 1, 1], [], []>} : vector<32x4xbf16>, vector<4x20xbf16>, vector<32x20xf32> -> vector<32x20xf32>
    %cst_5 = arith.constant 0.000000e+00 : f32
    %4 = vector.broadcast %cst_5 : f32 to vector<32x20xf32>
    %5 = arith.maximumf %3, %4 : vector<32x20xf32>
    %c0_6 = arith.constant 0 : index
    %c0_7 = arith.constant 0 : index
    %c0_8 = arith.constant 0 : index
    %c0_9 = arith.constant 0 : index
    %6 = vector.load %arg1[%c0_6, %c0_7, %c0_8, %c0_9] : memref<2x2x8x320xbf16, #tpu.memory_space<vmem>>, vector<2x2x8x320xbf16>
    %7 = vector.shape_cast %6 : vector<2x2x8x320xbf16> to vector<32x320xbf16>
    %c0_10 = arith.constant 0 : index
    %c0_11 = arith.constant 0 : index
    %8 = vector.load %arg5[%c0_10, %c0_11] : memref<320x500xbf16, #tpu.memory_space<vmem>>, vector<320x500xbf16>
    %cst_12 = arith.constant dense<0.000000e+00> : vector<32x500xf32>
    %9 = tpu.matmul %7, %8, %cst_12 {dimension_numbers = #tpu.dot_dimension_numbers<[1], [0], [0], [1], [0, 0, 1, 1], [], []>} : vector<32x320xbf16>, vector<320x500xbf16>, vector<32x500xf32> -> vector<32x500xf32>
    %10 = arith.truncf %5 : vector<32x20xf32> to vector<32x20xbf16>
    %c0_13 = arith.constant 0 : index
    %c0_14 = arith.constant 0 : index
    %11 = vector.load %arg6[%c0_13, %c0_14] : memref<20x500xbf16, #tpu.memory_space<vmem>>, vector<20x500xbf16>
    %cst_15 = arith.constant dense<0.000000e+00> : vector<32x500xf32>
    %12 = tpu.matmul %10, %11, %cst_15 {dimension_numbers = #tpu.dot_dimension_numbers<[1], [0], [0], [1], [0, 0, 1, 1], [], []>} : vector<32x20xbf16>, vector<20x500xbf16>, vector<32x500xf32> -> vector<32x500xf32>
    %13 = arith.addf %9, %12 : vector<32x500xf32>
    %14 = vector.extract_strided_slice %13 {offsets = [0, 0], sizes = [16, 500], strides = [1, 1]} : vector<32x500xf32> to vector<16x500xf32>
    %15 = arith.truncf %14 : vector<16x500xf32> to vector<16x500xbf16>
    %16 = vector.extract_strided_slice %13 {offsets = [16, 0], sizes = [16, 500], strides = [1, 1]} : vector<32x500xf32> to vector<16x500xf32>
    %17 = arith.truncf %16 : vector<16x500xf32> to vector<16x500xbf16>
    %c0_16 = arith.constant 0 : index
    %c0_17 = arith.constant 0 : index
    %c0_18 = arith.constant 0 : index
    %18 = vector.load %arg3[%c0_16, %c0_17, %c0_18] : memref<2x8x25xbf16, #tpu.memory_space<vmem>>, vector<2x8x25xbf16>
    %19 = vector.shape_cast %18 : vector<2x8x25xbf16> to vector<16x25xbf16>
    %c0_19 = arith.constant 0 : index
    %c0_20 = arith.constant 0 : index
    %20 = vector.load %arg7[%c0_19, %c0_20] : memref<25x200xbf16, #tpu.memory_space<vmem>>, vector<25x200xbf16>
    %cst_21 = arith.constant dense<0.000000e+00> : vector<16x200xf32>
    %21 = tpu.matmul %19, %20, %cst_21 {dimension_numbers = #tpu.dot_dimension_numbers<[1], [0], [0], [1], [0, 0, 1, 1], [], []>} : vector<16x25xbf16>, vector<25x200xbf16>, vector<16x200xf32> -> vector<16x200xf32>
    %22 = arith.truncf %21 : vector<16x200xf32> to vector<16x200xbf16>
    %c0_22 = arith.constant 0 : index
    %c0_23 = arith.constant 0 : index
    %23 = vector.load %arg8[%c0_22, %c0_23] : memref<500x192xbf16, #tpu.memory_space<vmem>>, vector<500x192xbf16>
    %cst_24 = arith.constant dense<0.000000e+00> : vector<16x192xf32>
    %24 = tpu.matmul %15, %23, %cst_24 {dimension_numbers = #tpu.dot_dimension_numbers<[1], [0], [0], [1], [0, 0, 1, 1], [], []>} : vector<16x500xbf16>, vector<500x192xbf16>, vector<16x192xf32> -> vector<16x192xf32>
    %c0_25 = arith.constant 0 : index
    %c0_26 = arith.constant 0 : index
    %25 = vector.load %arg9[%c0_25, %c0_26] : memref<200x192xbf16, #tpu.memory_space<vmem>>, vector<200x192xbf16>
    %cst_27 = arith.constant dense<0.000000e+00> : vector<16x192xf32>
    %26 = tpu.matmul %22, %25, %cst_27 {dimension_numbers = #tpu.dot_dimension_numbers<[1], [0], [0], [1], [0, 0, 1, 1], [], []>} : vector<16x200xbf16>, vector<200x192xbf16>, vector<16x192xf32> -> vector<16x192xf32>
    %27 = arith.addf %24, %26 : vector<16x192xf32>
    %c0_28 = arith.constant 0 : index
    %c0_29 = arith.constant 0 : index
    %28 = vector.load %arg10[%c0_28, %c0_29] : memref<500x192xbf16, #tpu.memory_space<vmem>>, vector<500x192xbf16>
    %cst_30 = arith.constant dense<0.000000e+00> : vector<16x192xf32>
    %29 = tpu.matmul %17, %28, %cst_30 {dimension_numbers = #tpu.dot_dimension_numbers<[1], [0], [0], [1], [0, 0, 1, 1], [], []>} : vector<16x500xbf16>, vector<500x192xbf16>, vector<16x192xf32> -> vector<16x192xf32>
    %30 = arith.addf %27, %29 : vector<16x192xf32>
    %31 = vector.extract_strided_slice %30 {offsets = [0, 0], sizes = [16, 48], strides = [1, 1]} : vector<16x192xf32> to vector<16x48xf32>
    %32 = vector.extract_strided_slice %30 {offsets = [0, 48], sizes = [16, 48], strides = [1, 1]} : vector<16x192xf32> to vector<16x48xf32>
    %c15_i32 = arith.constant 15 : i32
    %33 = tpu.dynamic_rotate %32 by %c15_i32 dim 0 : vector<16x48xf32>, i32 -> vector<16x48xf32>
    %34 = arith.addf %31, %33 : vector<16x48xf32>
    %35 = vector.extract_strided_slice %30 {offsets = [0, 96], sizes = [16, 48], strides = [1, 1]} : vector<16x192xf32> to vector<16x48xf32>
    %c14_i32 = arith.constant 14 : i32
    %36 = tpu.dynamic_rotate %35 by %c14_i32 dim 0 : vector<16x48xf32>, i32 -> vector<16x48xf32>
    %37 = arith.addf %34, %36 : vector<16x48xf32>
    %38 = vector.extract_strided_slice %30 {offsets = [0, 144], sizes = [16, 48], strides = [1, 1]} : vector<16x192xf32> to vector<16x48xf32>
    %c13_i32 = arith.constant 13 : i32
    %39 = tpu.dynamic_rotate %38 by %c13_i32 dim 0 : vector<16x48xf32>, i32 -> vector<16x48xf32>
    %40 = arith.addf %37, %39 : vector<16x48xf32>
    %cst_31 = arith.constant 0.000000e+00 : f32
    %41 = vector.broadcast %cst_31 : f32 to vector<16x48xf32>
    %42 = arith.maximumf %40, %41 : vector<16x48xf32>
    %43 = vector.shape_cast %42 : vector<16x48xf32> to vector<2x8x48xf32>
    %44 = tpu.iota {dimensions = array<i32: 1>} : vector<2x8x48xi32>
    %45 = tpu.iota {dimensions = array<i32: 2>} : vector<2x8x48xi32>
    %c16_i32 = arith.constant 16 : i32
    %46 = vector.broadcast %c16_i32 : i32 to vector<2x8x48xi32>
    %47 = arith.cmpi slt, %45, %46 : vector<2x8x48xi32>
    %c32_i32 = arith.constant 32 : i32
    %48 = vector.broadcast %c32_i32 : i32 to vector<2x8x48xi32>
    %49 = arith.cmpi slt, %45, %48 : vector<2x8x48xi32>
    %c3_i32 = arith.constant 3 : i32
    %c4_i32 = arith.constant 4 : i32
    %50 = vector.broadcast %c3_i32 : i32 to vector<2x8x48xi32>
    %51 = vector.broadcast %c4_i32 : i32 to vector<2x8x48xi32>
    %52 = arith.select %49, %50, %51 : vector<2x8x48xi1>, vector<2x8x48xi32>
    %c2_i32 = arith.constant 2 : i32
    %53 = vector.broadcast %c2_i32 : i32 to vector<2x8x48xi32>
    %54 = arith.select %47, %53, %52 : vector<2x8x48xi1>, vector<2x8x48xi32>
    %c8_i32 = arith.constant 8 : i32
    %55 = vector.broadcast %c8_i32 : i32 to vector<2x8x48xi32>
    %56 = arith.subi %55, %54 : vector<2x8x48xi32>
    %57 = arith.cmpi sle, %44, %56 : vector<2x8x48xi32>
    %cst_32 = arith.constant 0.000000e+00 : f32
    %58 = vector.broadcast %cst_32 : f32 to vector<2x8x48xf32>
    %59 = arith.select %57, %43, %58 : vector<2x8x48xi1>, vector<2x8x48xf32>
    %cst_33 = arith.constant dense<0xFF800000> : vector<2x48xf32>
    %60 = vector.multi_reduction <maximumf>, %59, %cst_33 [1] : vector<2x8x48xf32> to vector<2x48xf32>
    %61 = arith.truncf %60 : vector<2x48xf32> to vector<2x48xbf16>
    %c0_34 = arith.constant 0 : index
    %c0_35 = arith.constant 0 : index
    %62 = vector.load %arg11[%c0_34, %c0_35] : memref<48x2xbf16, #tpu.memory_space<vmem>>, vector<48x2xbf16>
    %cst_36 = arith.constant dense<0.000000e+00> : vector<2x2xf32>
    %63 = tpu.matmul %61, %62, %cst_36 {dimension_numbers = #tpu.dot_dimension_numbers<[1], [0], [0], [1], [0, 0, 1, 1], [], []>} : vector<2x48xbf16>, vector<48x2xbf16>, vector<2x2xf32> -> vector<2x2xf32>
    %cst_37 = arith.constant dense<0xFF800000> : vector<2xf32>
    %64 = vector.multi_reduction <maximumf>, %63, %cst_37 [1] : vector<2x2xf32> to vector<2xf32>
    %65 = vector.shape_cast %64 : vector<2xf32> to vector<2x1xf32>
    %66 = vector.broadcast %65 : vector<2x1xf32> to vector<2x2xf32>
    %67 = arith.subf %63, %66 : vector<2x2xf32>
    %68 = math.exp %67 : vector<2x2xf32>
    %cst_38 = arith.constant dense<0.000000e+00> : vector<2xf32>
    %69 = vector.multi_reduction <add>, %68, %cst_38 [1] : vector<2x2xf32> to vector<2xf32>
    %70 = vector.shape_cast %69 : vector<2xf32> to vector<2x1xf32>
    %71 = vector.broadcast %70 : vector<2x1xf32> to vector<2x2xf32>
    %72 = arith.divf %68, %71 : vector<2x2xf32>
    %c0_39 = arith.constant 0 : index
    %c0_40 = arith.constant 0 : index
    %73 = vector.load %arg12[%c0_39, %c0_40] : memref<2x2xf32, #tpu.memory_space<vmem>>, vector<2x2xf32>
    tpu.vector_store %arg12[%c0_39, %c0_40], %72 {strides = array<i32>} : memref<2x2xf32, #tpu.memory_space<vmem>>, vector<2x2xf32>,
    return
  }
  func.func @transform_0(%arg0: i32) -> (i32, i32, i32, i32) {
    %c0_i32 = arith.constant 0 : i32
    %c0_i32_0 = arith.constant 0 : i32
    %c0_i32_1 = arith.constant 0 : i32
    %c0_i32_2 = arith.constant 0 : i32
    return %c0_i32, %arg0, %c0_i32_0, %c0_i32_1 : i32, i32, i32, i32
  }
  func.func @transform_1(%arg0: i32) -> (i32, i32, i32, i32) {
    %c0_i32 = arith.constant 0 : i32
    %c0_i32_0 = arith.constant 0 : i32
    %c0_i32_1 = arith.constant 0 : i32
    %c0_i32_2 = arith.constant 0 : i32
    return %c0_i32, %arg0, %c0_i32_0, %c0_i32_1 : i32, i32, i32, i32
  }
  func.func @transform_2(%arg0: i32) -> (i32, i32, i32) {
    %c0_i32 = arith.constant 0 : i32
    %c0_i32_0 = arith.constant 0 : i32
    %c0_i32_1 = arith.constant 0 : i32
    return %arg0, %c0_i32, %c0_i32_0 : i32, i32, i32
  }
  func.func @transform_3(%arg0: i32) -> (i32, i32) {
    %c0_i32 = arith.constant 0 : i32
    %c0_i32_0 = arith.constant 0 : i32
    %c0_i32_1 = arith.constant 0 : i32
    return %c0_i32, %c0_i32_0 : i32, i32
  }
  func.func @transform_4(%arg0: i32) -> (i32, i32) {
    %c0_i32 = arith.constant 0 : i32
    %c0_i32_0 = arith.constant 0 : i32
    %c0_i32_1 = arith.constant 0 : i32
    return %c0_i32, %c0_i32_0 : i32, i32
  }
  func.func @transform_5(%arg0: i32) -> (i32, i32) {
    %c0_i32 = arith.constant 0 : i32
    %c0_i32_0 = arith.constant 0 : i32
    %c0_i32_1 = arith.constant 0 : i32
    return %c0_i32, %c0_i32_0 : i32, i32
  }
  func.func @transform_6(%arg0: i32) -> (i32, i32) {
    %c0_i32 = arith.constant 0 : i32
    %c0_i32_0 = arith.constant 0 : i32
    %c0_i32_1 = arith.constant 0 : i32
    return %c0_i32, %c0_i32_0 : i32, i32
  }
  func.func @transform_7(%arg0: i32) -> (i32, i32) {
    %c0_i32 = arith.constant 0 : i32
    %c0_i32_0 = arith.constant 0 : i32
    %c0_i32_1 = arith.constant 0 : i32
    return %c0_i32, %c0_i32_0 : i32, i32
  }
  func.func @transform_8(%arg0: i32) -> (i32, i32) {
    %c0_i32 = arith.constant 0 : i32
    %c0_i32_0 = arith.constant 0 : i32
    %c0_i32_1 = arith.constant 0 : i32
    return %c0_i32, %c0_i32_0 : i32, i32
  }
  func.func @transform_9(%arg0: i32) -> (i32, i32) {
    %c0_i32 = arith.constant 0 : i32
    %c0_i32_0 = arith.constant 0 : i32
    %c0_i32_1 = arith.constant 0 : i32
    return %c0_i32, %c0_i32_0 : i32, i32
  }
  func.func @transform_10(%arg0: i32) -> (i32, i32) {
    %c0_i32 = arith.constant 0 : i32
    %c0_i32_0 = arith.constant 0 : i32
    %c0_i32_1 = arith.constant 0 : i32
    return %c0_i32, %c0_i32_0 : i32, i32
  }
  func.func @transform_11(%arg0: i32) -> (i32, i32) {
    %c0_i32 = arith.constant 0 : i32
    %c0_i32_0 = arith.constant 0 : i32
    return %arg0, %c0_i32 : i32, i32
  }
}

</mosaic_0001>

<llo_original>
// kernel: run_model.1
$region0: #{run_model.1}
  #allocation0 [shape = 'u32[]', space=smem, size = 0x4, offset = 0x4, fixed_abs, tag = 'smem constant byte address 0x4 - core index']
  #allocation1 [shape = 'u32[144,128]{1,0:T(1,128)}', space=vmem, size = 0x12000, scoped, tag = 'internal scratch']
  %s0 = inlined_call_operand.vmem [shape: bf16[2,2,8,320], index: 0, kind: input, shape index: {}]
  %s1 = inlined_call_operand.vmem [shape: bf16[2,2,8,4], index: 1, kind: input, shape index: {}]
  %s2 = inlined_call_operand.vmem [shape: bf16[2,8,25], index: 2, kind: input, shape index: {}]
  %s3 = inlined_call_operand.vmem [shape: bf16[4,20], index: 3, kind: input, shape index: {}]
  %s4 = inlined_call_operand.vmem [shape: bf16[320,500], index: 4, kind: input, shape index: {}]
  %s5 = inlined_call_operand.vmem [shape: bf16[20,500], index: 5, kind: input, shape index: {}]
  %s6 = inlined_call_operand.vmem [shape: bf16[25,200], index: 6, kind: input, shape index: {}]
  %s7 = inlined_call_operand.vmem [shape: bf16[500,192], index: 7, kind: input, shape index: {}]
  %s8 = inlined_call_operand.vmem [shape: bf16[200,192], index: 8, kind: input, shape index: {}]
  %s9 = inlined_call_operand.vmem [shape: bf16[500,192], index: 9, kind: input, shape index: {}]
  %s10 = inlined_call_operand.vmem [shape: bf16[48,2], index: 10, kind: input, shape index: {}]
  %s11 = inlined_call_operand.hbm [shape: f32[2,2], index: 11, kind: output, shape index: {}]
  %s12 = sld [smem:[#allocation0]]
  $region54: #{run_model.1} parent=0
    _
  %s14 = ssub.s32 1, %s12
  %s15 = scalar_select 0, %s14, %s12
  $region1: #{run_model.1} parent=0
    #allocation2 [shape = 'u8[1024]{0}', space=vmem, size = 0x400, scoped, tag = 'output window, operand 0, single buffered']
    #allocation3 [shape = 's32[1]{0}', space=sflag, size = 0x4, scoped, tag = 'scoped memory for run_model.1']
    %16 = vsyncpa [#allocation3], 0
    // Predicated region
    $region2: #{run_model.1} parent=1 // pred_check
      _
    $region3: #{run_model.1} parent=1 // pred_check_branch
      %18 = sbr.rel (0) target = $region5
    $region4: #{run_model.1} parent=1 // pred_region
      _
    $region5: #{run_model.1} parent=1 // pred_fallthru
      _
    // Predicated region
    $region6: #{run_model.1} parent=1 // pred_check
      _
    $region7: #{run_model.1} parent=1 // pred_check_branch
      %20 = sbr.rel (0) target = $region9
    $region8: #{run_model.1} parent=1 // pred_region
      _
    $region9: #{run_model.1} parent=1 // pred_fallthru
      _
    // Predicated region
    $region10: #{run_model.1} parent=1 // pred_check
      _
    $region11: #{run_model.1} parent=1 // pred_check_branch
      %22 = sbr.rel (0) target = $region13
    $region12: #{run_model.1} parent=1 // pred_region
      _
    $region13: #{run_model.1} parent=1 // pred_fallthru
      _
    // Predicated region
    $region14: #{run_model.1} parent=1 // pred_check
      _
    $region15: #{run_model.1} parent=1 // pred_check_branch
      %24 = sbr.rel (0) target = $region17
    $region16: #{run_model.1} parent=1 // pred_region
      _
    $region17: #{run_model.1} parent=1 // pred_fallthru
      _
    // Predicated region
    $region18: #{run_model.1} parent=1 // pred_check
      _
    $region19: #{run_model.1} parent=1 // pred_check_branch
      %26 = sbr.rel (0) target = $region21
    $region20: #{run_model.1} parent=1 // pred_region
      _
    $region21: #{run_model.1} parent=1 // pred_fallthru
      _
    // Predicated region
    $region22: #{run_model.1} parent=1 // pred_check
      _
    $region23: #{run_model.1} parent=1 // pred_check_branch
      %28 = sbr.rel (0) target = $region25
    $region24: #{run_model.1} parent=1 // pred_region
      _
    $region25: #{run_model.1} parent=1 // pred_fallthru
      _
    // Predicated region
    $region26: #{run_model.1} parent=1 // pred_check
      _
    $region27: #{run_model.1} parent=1 // pred_check_branch
      %30 = sbr.rel (0) target = $region29
    $region28: #{run_model.1} parent=1 // pred_region
      _
    $region29: #{run_model.1} parent=1 // pred_fallthru
      _
    // Predicated region
    $region30: #{run_model.1} parent=1 // pred_check
      _
    $region31: #{run_model.1} parent=1 // pred_check_branch
      %32 = sbr.rel (0) target = $region33
    $region32: #{run_model.1} parent=1 // pred_region
      _
    $region33: #{run_model.1} parent=1 // pred_fallthru
      _
    // Predicated region
    $region34: #{run_model.1} parent=1 // pred_check
      _
    $region35: #{run_model.1} parent=1 // pred_check_branch
      %34 = sbr.rel (0) target = $region37
    $region36: #{run_model.1} parent=1 // pred_region
      _
    $region37: #{run_model.1} parent=1 // pred_fallthru
      _
    // Predicated region
    $region38: #{run_model.1} parent=1 // pred_check
      _
    $region39: #{run_model.1} parent=1 // pred_check_branch
      %36 = sbr.rel (0) target = $region41
    $region40: #{run_model.1} parent=1 // pred_region
      _
    $region41: #{run_model.1} parent=1 // pred_fallthru
      _
    // Predicated region
    $region42: #{run_model.1} parent=1 // pred_check
      _
    $region43: #{run_model.1} parent=1 // pred_check_branch
      %38 = sbr.rel (0) target = $region45
    $region44: #{run_model.1} parent=1 // pred_region
      _
    $region45: #{run_model.1} parent=1 // pred_fallthru
      _
    %v40 = vld [vmem:[%s1] sm:$0xf]
    %v41 = vld [vmem:[%s1 + $0x4] sm:$0xf]
    %v42 = vld [vmem:[%s1 + $0x8] sm:$0xf]
    %v43 = vld [vmem:[%s1 + $0xc] sm:$0xf]
    %v44 = vld [vmem:[%s3] sm:$0x3]
    %v49 = vunpack.c.l.b16 %v40
    %v50 = vunpack.c.l.b16 %v41
    %v51 = vunpack.c.l.b16 %v42
    %v52 = vunpack.c.l.b16 %v43
    %v53 = vpack.c.b16 %v50, %v49
    %v54 = vpack.c.b16 %v52, %v51
    %vm55 = vcmask 31744
    %v57 = vsel %vm55, %v53, 0
    %v60 = vsel %vm55, %v54, 0
    %vm62 = vcmask 1041408
    %v64 = vsel %vm62, %v44, 0
    %66 = vmatprep.subr.bf16.mxu0 0
    %67 = vmatpush1.bf16.msra.mxu0 %v64
    %68 = vmatprep.subr.bf16.mxu0 0
    %69 = vmatpush1.bf16.msra.mxu0 0
    %70 = vmatprep.subr.bf16.mxu0 0
    %71 = vmatpush1.bf16.msra.mxu0 0
    %72 = vmatprep.subr.bf16.mxu0 0
    %73 = vmatpush1.bf16.msra.mxu0 0
    %74 = vmatprep.subr.bf16.mxu0 0
    %75 = vmatpush1.bf16.msra.mxu0 0
    %76 = vmatprep.subr.bf16.mxu0 0
    %77 = vmatpush1.bf16.msra.mxu0 0
    %78 = vmatprep.subr.bf16.mxu0 0
    %79 = vmatpush1.bf16.msra.mxu0 0
    %80 = vmatprep.subr.bf16.mxu0 0
    %81 = vmatpush1.bf16.msra.mxu0 0
    %82 = vmatprep.subr.bf16.mxu0 0
    %83 = vmatpush1.bf16.msra.mxu0 0
    %84 = vmatprep.subr.bf16.mxu0 0
    %85 = vmatpush1.bf16.msra.mxu0 0
    %86 = vmatprep.subr.bf16.mxu0 0
    %87 = vmatpush1.bf16.msra.mxu0 0
    %88 = vmatprep.subr.bf16.mxu0 0
    %89 = vmatpush1.bf16.msra.mxu0 0
    %90 = vmatprep.subr.bf16.mxu0 0
    %91 = vmatpush1.bf16.msra.mxu0 0
    %92 = vmatprep.subr.bf16.mxu0 0
    %93 = vmatpush1.bf16.msra.mxu0 0
    %94 = vmatprep.subr.bf16.mxu0 0
    %95 = vmatpush1.bf16.msra.mxu0 0
    %96 = vmatprep.subr.bf16.mxu0 0
    %97 = vmatpush1.bf16.msra.mxu0 0
    %98 = vmatprep.mubr.bf16.mxu0 0
    %99 = vmatmul.mubr.bf16.gmra.mrb[0].mxu0 %v57
    %v100 = vpop.f32.mrb[0].mxu0
    %v101 = vadd.f32 0.0, %v100
    %v102 = vpop.f32.mrb[0].mxu0
    %v103 = vpop.f32.mrb[0].mxu0
    %v104 = vadd.f32 0.0, %v103
    %v105 = vpop.f32.mrb[0].mxu0
    %106 = vmatprep.mubr.bf16.mxu0 0
    %107 = vmatmul.mubr.bf16.gmra.mrb[0].mxu0 %v60
    %v108 = vpop.f32.mrb[0].mxu0
    %v109 = vadd.f32 0.0, %v108
    %v110 = vpop.f32.mrb[0].mxu0
    %v111 = vpop.f32.mrb[0].mxu0
    %v112 = vadd.f32 0.0, %v111
    %v113 = vpop.f32.mrb[0].mxu0
    %114 = vdwg.mxu0
    %v115 = vmax.f32 %v101, 0.0
    %v116 = vmax.f32 %v104, 0.0
    %v117 = vmax.f32 %v109, 0.0
    %v118 = vmax.f32 %v112, 0.0
    %v119 = vld [vmem:[%s0] sm:$0xff]
    %v120 = vld [vmem:[%s0 + $0x8] sm:$0xf]
    %v121 = vld [vmem:[%s0 + $0xc] sm:$0xff]
    %v122 = vld [vmem:[%s0 + $0x14] sm:$0xf]
    %v123 = vld [vmem:[%s0 + $0x18] sm:$0xff]
    %v124 = vld [vmem:[%s0 + $0x20] sm:$0xf]
    %v125 = vld [vmem:[%s0 + $0x24] sm:$0xff]
    %v126 = vld [vmem:[%s0 + $0x2c] sm:$0xf]
    %v127 = vld [vmem:[%s4] sm:$0xff]
    %v128 = vld [vmem:[%s4 + $0x8] sm:$0xff]
    %v129 = vld [vmem:[%s4 + $0x10] sm:$0xff]
    %v130 = vld [vmem:[%s4 + $0x18] sm:$0xff]
    %v131 = vld [vmem:[%s4 + $0x20] sm:$0xff]
    %v132 = vld [vmem:[%s4 + $0x28] sm:$0xff]
    %v133 = vld [vmem:[%s4 + $0x30] sm:$0xff]
    %v134 = vld [vmem:[%s4 + $0x38] sm:$0xff]
    %v135 = vld [vmem:[%s4 + $0x40] sm:$0xff]
    %v136 = vld [vmem:[%s4 + $0x48] sm:$0xff]
    %v137 = vld [vmem:[%s4 + $0x50] sm:$0xff]
    %v138 = vld [vmem:[%s4 + $0x58] sm:$0xff]
    %v139 = vld [vmem:[%s4 + $0x60] sm:$0xff]
    %v140 = vld [vmem:[%s4 + $0x68] sm:$0xff]
    %v141 = vld [vmem:[%s4 + $0x70] sm:$0xff]
    %v142 = vld [vmem:[%s4 + $0x78] sm:$0xff]
    %v143 = vld [vmem:[%s4 + $0x80] sm:$0xff]
    %v144 = vld [vmem:[%s4 + $0x88] sm:$0xff]
    %v145 = vld [vmem:[%s4 + $0x90] sm:$0xff]
    %v146 = vld [vmem:[%s4 + $0x98] sm:$0xff]
    %v147 = vld [vmem:[%s4 + $0xa0] sm:$0xff]
    %v148 = vld [vmem:[%s4 + $0xa8] sm:$0xff]
    %v149 = vld [vmem:[%s4 + $0xb0] sm:$0xff]
    %v150 = vld [vmem:[%s4 + $0xb8] sm:$0xff]
    %v151 = vld [vmem:[%s4 + $0xc0] sm:$0xff]
    %v152 = vld [vmem:[%s4 + $0xc8] sm:$0xff]
    %v153 = vld [vmem:[%s4 + $0xd0] sm:$0xff]
    %v154 = vld [vmem:[%s4 + $0xd8] sm:$0xff]
    %v155 = vld [vmem:[%s4 + $0xe0] sm:$0xff]
    %v156 = vld [vmem:[%s4 + $0xe8] sm:$0xff]
    %v157 = vld [vmem:[%s4 + $0xf0] sm:$0xff]
    %v158 = vld [vmem:[%s4 + $0xf8] sm:$0xff]
    %v159 = vld [vmem:[%s4 + $0x100] sm:$0xff]
    %v160 = vld [vmem:[%s4 + $0x108] sm:$0xff]
    %v161 = vld [vmem:[%s4 + $0x110] sm:$0xff]
    %v162 = vld [vmem:[%s4 + $0x118] sm:$0xff]
    %v163 = vld [vmem:[%s4 + $0x120] sm:$0xff]
    %v164 = vld [vmem:[%s4 + $0x128] sm:$0xff]
    %v165 = vld [vmem:[%s4 + $0x130] sm:$0xff]
    %v166 = vld [vmem:[%s4 + $0x138] sm:$0xff]
    %v167 = vld [vmem:[%s4 + $0x140] sm:$0xff]
    %v168 = vld [vmem:[%s4 + $0x148] sm:$0xff]
    %v169 = vld [vmem:[%s4 + $0x150] sm:$0xff]
    %v170 = vld [vmem:[%s4 + $0x158] sm:$0xff]
    %v171 = vld [vmem:[%s4 + $0x160] sm:$0xff]
    %v172 = vld [vmem:[%s4 + $0x168] sm:$0xff]
    %v173 = vld [vmem:[%s4 + $0x170] sm:$0xff]
    %v174 = vld [vmem:[%s4 + $0x178] sm:$0xff]
    %v175 = vld [vmem:[%s4 + $0x180] sm:$0xff]
    %v176 = vld [vmem:[%s4 + $0x188] sm:$0xff]
    %v177 = vld [vmem:[%s4 + $0x190] sm:$0xff]
    %v178 = vld [vmem:[%s4 + $0x198] sm:$0xff]
    %v179 = vld [vmem:[%s4 + $0x1a0] sm:$0xff]
    %v180 = vld [vmem:[%s4 + $0x1a8] sm:$0xff]
    %v181 = vld [vmem:[%s4 + $0x1b0] sm:$0xff]
    %v182 = vld [vmem:[%s4 + $0x1b8] sm:$0xff]
    %v183 = vld [vmem:[%s4 + $0x1c0] sm:$0xff]
    %v184 = vld [vmem:[%s4 + $0x1c8] sm:$0xff]
    %v185 = vld [vmem:[%s4 + $0x1d0] sm:$0xff]
    %v186 = vld [vmem:[%s4 + $0x1d8] sm:$0xff]
    %v187 = vld [vmem:[%s4 + $0x1e0] sm:$0xff]
    %v188 = vld [vmem:[%s4 + $0x1e8] sm:$0xff]
    %v189 = vld [vmem:[%s4 + $0x1f0] sm:$0xff]
    %v190 = vld [vmem:[%s4 + $0x1f8] sm:$0xff]
    %v191 = vld [vmem:[%s4 + $0x200] sm:$0xff]
    %v192 = vld [vmem:[%s4 + $0x208] sm:$0xff]
    %v193 = vld [vmem:[%s4 + $0x210] sm:$0xff]
    %v194 = vld [vmem:[%s4 + $0x218] sm:$0xff]
    %v195 = vld [vmem:[%s4 + $0x220] sm:$0xff]
    %v196 = vld [vmem:[%s4 + $0x228] sm:$0xff]
    %v197 = vld [vmem:[%s4 + $0x230] sm:$0xff]
    %v198 = vld [vmem:[%s4 + $0x238] sm:$0xff]
    %v199 = vld [vmem:[%s4 + $0x240] sm:$0xff]
    %v200 = vld [vmem:[%s4 + $0x248] sm:$0xff]
    %v201 = vld [vmem:[%s4 + $0x250] sm:$0xff]
    %v202 = vld [vmem:[%s4 + $0x258] sm:$0xff]
    %v203 = vld [vmem:[%s4 + $0x260] sm:$0xff]
    %v204 = vld [vmem:[%s4 + $0x268] sm:$0xff]
    %v205 = vld [vmem:[%s4 + $0x270] sm:$0xff]
    %v206 = vld [vmem:[%s4 + $0x278] sm:$0xff]
    %v207 = vpack.c.bf16 %v116, %v115
    %v208 = vpack.c.bf16 %v118, %v117
    %v209 = vld [vmem:[%s5] sm:$0xff]
    %v210 = vld [vmem:[%s5 + $0x8] sm:$0xff]
    %v211 = vld [vmem:[%s5 + $0x10] sm:$0xff]
    %v212 = vld [vmem:[%s5 + $0x18] sm:$0xff]
    %v213 = vld [vmem:[%s5 + $0x20] sm:$0x33]
    %v214 = vld [vmem:[%s5 + $0x28] sm:$0x33]
    %v221 = vunpack.c.l.b16 %v209
    %v222 = vunpack.c.h.b16 %v209
    %v223 = vunpack.c.l.b16 %v210
    %v224 = vunpack.c.h.b16 %v210
    %v225 = vunpack.c.l.b16 %v211
    %v226 = vunpack.c.h.b16 %v211
    %v227 = vunpack.c.l.b16 %v212
    %v228 = vunpack.c.h.b16 %v212
    %v229 = vunpack.c.l.b16 %v213
    %v230 = vunpack.c.h.b16 %v213
    %v231 = vunpack.c.l.b16 %v214
    %v232 = vunpack.c.h.b16 %v214
    %v233 = vpack.c.b16 %v225, %v221
    %v234 = vpack.c.b16 %v226, %v222
    %v235 = vpack.c.b16 %v227, %v223
    %v236 = vpack.c.b16 %v228, %v224
    %v237 = vpack.c.b16 %v229, %v229
    %v238 = vpack.c.b16 %v230, %v230
    %v239 = vpack.c.b16 %v231, %v231
    %v240 = vpack.c.b16 %v232, %v232
    %vm245 = vcmask 162816
    %v247 = vsel %vm245, %v207, 0
    %v250 = vsel %vm245, %v208, 0
    %v253 = vsel %vm62, %v237, 0
    %v256 = vsel %vm62, %v238, 0
    %v259 = vsel %vm62, %v239, 0
    %v262 = vsel %vm62, %v240, 0
    %264 = vmatprep.subr.bf16.mxu0 %v234
    %265 = vmatpush1.bf16.msra.mxu0 %v233
    %266 = vmatprep.subr.bf16.mxu0 %v256
    %267 = vmatpush1.bf16.msra.mxu0 %v253
    %268 = vmatprep.subr.bf16.mxu0 0
    %269 = vmatpush1.bf16.msra.mxu0 0
    %270 = vmatprep.subr.bf16.mxu0 0
    %271 = vmatpush1.bf16.msra.mxu0 0
    %272 = vmatprep.subr.bf16.mxu0 0
    %273 = vmatpush1.bf16.msra.mxu0 0
    %274 = vmatprep.subr.bf16.mxu0 0
    %275 = vmatpush1.bf16.msra.mxu0 0
    %276 = vmatprep.subr.bf16.mxu0 0
    %277 = vmatpush1.bf16.msra.mxu0 0
    %278 = vmatprep.subr.bf16.mxu0 0
    %279 = vmatpush1.bf16.msra.mxu0 0
    %280 = vmatprep.subr.bf16.mxu0 0
    %281 = vmatpush1.bf16.msra.mxu0 0
    %282 = vmatprep.subr.bf16.mxu0 0
    %283 = vmatpush1.bf16.msra.mxu0 0
    %284 = vmatprep.subr.bf16.mxu0 0
    %285 = vmatpush1.bf16.msra.mxu0 0
    %286 = vmatprep.subr.bf16.mxu0 0
    %287 = vmatpush1.bf16.msra.mxu0 0
    %288 = vmatprep.subr.bf16.mxu0 0
    %289 = vmatpush1.bf16.msra.mxu0 0
    %290 = vmatprep.subr.bf16.mxu0 0
    %291 = vmatpush1.bf16.msra.mxu0 0
    %292 = vmatprep.subr.bf16.mxu0 0
    %293 = vmatpush1.bf16.msra.mxu0 0
    %294 = vmatprep.subr.bf16.mxu0 0
    %295 = vmatpush1.bf16.msra.mxu0 0
    %296 = vmatprep.mubr.bf16.mxu0 0
    %297 = vmatmul.mubr.bf16.gmra.mrb[0].mxu0 %v247
    %v298 = vpop.f32.mrb[0].mxu0
    %v299 = vadd.f32 0.0, %v298
    %v300 = vpop.f32.mrb[0].mxu0
    %v301 = vadd.f32 0.0, %v300
    %v302 = vpop.f32.mrb[0].mxu0
    %v303 = vadd.f32 0.0, %v302
    %v304 = vpop.f32.mrb[0].mxu0
    %v305 = vadd.f32 0.0, %v304
    %306 = vmatprep.mubr.bf16.mxu0 0
    %307 = vmatmul.mubr.bf16.gmra.mrb[0].mxu0 %v250
    %v308 = vpop.f32.mrb[0].mxu0
    %v309 = vadd.f32 0.0, %v308
    %v310 = vpop.f32.mrb[0].mxu0
    %v311 = vadd.f32 0.0, %v310
    %v312 = vpop.f32.mrb[0].mxu0
    %v313 = vadd.f32 0.0, %v312
    %v314 = vpop.f32.mrb[0].mxu0
    %v315 = vadd.f32 0.0, %v314
    %316 = vdwg.mxu0
    %317 = vmatprep.subr.bf16.mxu0 %v236
    %318 = vmatpush1.bf16.msra.mxu0 %v235
    %319 = vmatprep.subr.bf16.mxu0 %v262
    %320 = vmatpush1.bf16.msra.mxu0 %v259
    %321 = vmatprep.subr.bf16.mxu0 0
    %322 = vmatpush1.bf16.msra.mxu0 0
    %323 = vmatprep.subr.bf16.mxu0 0
    %324 = vmatpush1.bf16.msra.mxu0 0
    %325 = vmatprep.subr.bf16.mxu0 0
    %326 = vmatpush1.bf16.msra.mxu0 0
    %327 = vmatprep.subr.bf16.mxu0 0
    %328 = vmatpush1.bf16.msra.mxu0 0
    %329 = vmatprep.subr.bf16.mxu0 0
    %330 = vmatpush1.bf16.msra.mxu0 0
    %331 = vmatprep.subr.bf16.mxu0 0
    %332 = vmatpush1.bf16.msra.mxu0 0
    %333 = vmatprep.subr.bf16.mxu0 0
    %334 = vmatpush1.bf16.msra.mxu0 0
    %335 = vmatprep.subr.bf16.mxu0 0
    %336 = vmatpush1.bf16.msra.mxu0 0
    %337 = vmatprep.subr.bf16.mxu0 0
    %338 = vmatpush1.bf16.msra.mxu0 0
    %339 = vmatprep.subr.bf16.mxu0 0
    %340 = vmatpush1.bf16.msra.mxu0 0
    %341 = vmatprep.subr.bf16.mxu0 0
    %342 = vmatpush1.bf16.msra.mxu0 0
    %343 = vmatprep.subr.bf16.mxu0 0
    %344 = vmatpush1.bf16.msra.mxu0 0
    %345 = vmatprep.subr.bf16.mxu0 0
    %346 = vmatpush1.bf16.msra.mxu0 0
    %347 = vmatprep.subr.bf16.mxu0 0
    %348 = vmatpush1.bf16.msra.mxu0 0
    %349 = vmatprep.mubr.bf16.mxu0 0
    %350 = vmatmul.mubr.bf16.gmra.mrb[0].mxu0 %v247
    %v351 = vpop.f32.mrb[0].mxu0
    %v352 = vadd.f32 0.0, %v351
    %v353 = vpop.f32.mrb[0].mxu0
    %v354 = vadd.f32 0.0, %v353
    %v355 = vpop.f32.mrb[0].mxu0
    %v356 = vadd.f32 0.0, %v355
    %v357 = vpop.f32.mrb[0].mxu0
    %v358 = vadd.f32 0.0, %v357
    %359 = vmatprep.mubr.bf16.mxu0 0
    %360 = vmatmul.mubr.bf16.gmra.mrb[0].mxu0 %v250
    %v361 = vpop.f32.mrb[0].mxu0
    %v362 = vadd.f32 0.0, %v361
    %v363 = vpop.f32.mrb[0].mxu0
    %v364 = vadd.f32 0.0, %v363
    %v365 = vpop.f32.mrb[0].mxu0
    %v366 = vadd.f32 0.0, %v365
    %v367 = vpop.f32.mrb[0].mxu0
    %v368 = vadd.f32 0.0, %v367
    %369 = vdwg.mxu0
    %v378 = vunpack.c.l.b16 %v119
    %v379 = vunpack.c.h.b16 %v119
    %v380 = vunpack.c.l.b16 %v120
    %v381 = vunpack.c.l.b16 %v121
    %v382 = vunpack.c.h.b16 %v121
    %v383 = vunpack.c.l.b16 %v122
    %v384 = vunpack.c.l.b16 %v123
    %v385 = vunpack.c.h.b16 %v123
    %v386 = vunpack.c.l.b16 %v124
    %v387 = vunpack.c.l.b16 %v125
    %v388 = vunpack.c.h.b16 %v125
    %v389 = vunpack.c.l.b16 %v126
    %v390 = vpack.c.b16 %v381, %v378
    %v391 = vpack.c.b16 %v382, %v379
    %v392 = vpack.c.b16 %v383, %v380
    %v393 = vpack.c.b16 %v387, %v384
    %v394 = vpack.c.b16 %v388, %v385
    %v395 = vpack.c.b16 %v389, %v386
    %v480 = vunpack.c.l.b16 %v127
    %v481 = vunpack.c.h.b16 %v127
    %v482 = vunpack.c.l.b16 %v128
    %v483 = vunpack.c.h.b16 %v128
    %v484 = vunpack.c.l.b16 %v129
    %v485 = vunpack.c.h.b16 %v129
    %v486 = vunpack.c.l.b16 %v130
    %v487 = vunpack.c.h.b16 %v130
    %v488 = vunpack.c.l.b16 %v131
    %v489 = vunpack.c.h.b16 %v131
    %v490 = vunpack.c.l.b16 %v132
    %v491 = vunpack.c.h.b16 %v132
    %v492 = vunpack.c.l.b16 %v133
    %v493 = vunpack.c.h.b16 %v133
    %v494 = vunpack.c.l.b16 %v134
    %v495 = vunpack.c.h.b16 %v134
    %v496 = vunpack.c.l.b16 %v135
    %v497 = vunpack.c.h.b16 %v135
    %v498 = vunpack.c.l.b16 %v136
    %v499 = vunpack.c.h.b16 %v136
    %v500 = vunpack.c.l.b16 %v137
    %v501 = vunpack.c.h.b16 %v137
    %v502 = vunpack.c.l.b16 %v138
    %v503 = vunpack.c.h.b16 %v138
    %v504 = vunpack.c.l.b16 %v139
    %v505 = vunpack.c.h.b16 %v139
    %v506 = vunpack.c.l.b16 %v140
    %v507 = vunpack.c.h.b16 %v140
    %v508 = vunpack.c.l.b16 %v141
    %v509 = vunpack.c.h.b16 %v141
    %v510 = vunpack.c.l.b16 %v142
    %v511 = vunpack.c.h.b16 %v142
    %v512 = vunpack.c.l.b16 %v143
    %v513 = vunpack.c.h.b16 %v143
    %v514 = vunpack.c.l.b16 %v144
    %v515 = vunpack.c.h.b16 %v144
    %v516 = vunpack.c.l.b16 %v145
    %v517 = vunpack.c.h.b16 %v145
    %v518 = vunpack.c.l.b16 %v146
    %v519 = vunpack.c.h.b16 %v146
    %v520 = vunpack.c.l.b16 %v147
    %v521 = vunpack.c.h.b16 %v147
    %v522 = vunpack.c.l.b16 %v148
    %v523 = vunpack.c.h.b16 %v148
    %v524 = vunpack.c.l.b16 %v149
    %v525 = vunpack.c.h.b16 %v149
    %v526 = vunpack.c.l.b16 %v150
    %v527 = vunpack.c.h.b16 %v150
    %v528 = vunpack.c.l.b16 %v151
    %v529 = vunpack.c.h.b16 %v151
    %v530 = vunpack.c.l.b16 %v152
    %v531 = vunpack.c.h.b16 %v152
    %v532 = vunpack.c.l.b16 %v153
    %v533 = vunpack.c.h.b16 %v153
    %v534 = vunpack.c.l.b16 %v154
    %v535 = vunpack.c.h.b16 %v154
    %v536 = vunpack.c.l.b16 %v155
    %v537 = vunpack.c.h.b16 %v155
    %v538 = vunpack.c.l.b16 %v156
    %v539 = vunpack.c.h.b16 %v156
    %v540 = vunpack.c.l.b16 %v157
    %v541 = vunpack.c.h.b16 %v157
    %v542 = vunpack.c.l.b16 %v158
    %v543 = vunpack.c.h.b16 %v158
    %v544 = vunpack.c.l.b16 %v159
    %v545 = vunpack.c.h.b16 %v159
    %v546 = vunpack.c.l.b16 %v160
    %v547 = vunpack.c.h.b16 %v160
    %v548 = vunpack.c.l.b16 %v161
    %v549 = vunpack.c.h.b16 %v161
    %v550 = vunpack.c.l.b16 %v162
    %v551 = vunpack.c.h.b16 %v162
    %v552 = vunpack.c.l.b16 %v163
    %v553 = vunpack.c.h.b16 %v163
    %v554 = vunpack.c.l.b16 %v164
    %v555 = vunpack.c.h.b16 %v164
    %v556 = vunpack.c.l.b16 %v165
    %v557 = vunpack.c.h.b16 %v165
    %v558 = vunpack.c.l.b16 %v166
    %v559 = vunpack.c.h.b16 %v166
    %v560 = vunpack.c.l.b16 %v167
    %v561 = vunpack.c.h.b16 %v167
    %v562 = vunpack.c.l.b16 %v168
    %v563 = vunpack.c.h.b16 %v168
    %v564 = vunpack.c.l.b16 %v169
    %v565 = vunpack.c.h.b16 %v169
    %v566 = vunpack.c.l.b16 %v170
    %v567 = vunpack.c.h.b16 %v170
    %v568 = vunpack.c.l.b16 %v171
    %v569 = vunpack.c.h.b16 %v171
    %v570 = vunpack.c.l.b16 %v172
    %v571 = vunpack.c.h.b16 %v172
    %v572 = vunpack.c.l.b16 %v173
    %v573 = vunpack.c.h.b16 %v173
    %v574 = vunpack.c.l.b16 %v174
    %v575 = vunpack.c.h.b16 %v174
    %v576 = vunpack.c.l.b16 %v175
    %v577 = vunpack.c.h.b16 %v175
    %v578 = vunpack.c.l.b16 %v176
    %v579 = vunpack.c.h.b16 %v176
    %v580 = vunpack.c.l.b16 %v177
    %v581 = vunpack.c.h.b16 %v177
    %v582 = vunpack.c.l.b16 %v178
    %v583 = vunpack.c.h.b16 %v178
    %v584 = vunpack.c.l.b16 %v179
    %v585 = vunpack.c.h.b16 %v179
    %v586 = vunpack.c.l.b16 %v180
    %v587 = vunpack.c.h.b16 %v180
    %v588 = vunpack.c.l.b16 %v181
    %v589 = vunpack.c.h.b16 %v181
    %v590 = vunpack.c.l.b16 %v182
    %v591 = vunpack.c.h.b16 %v182
    %v592 = vunpack.c.l.b16 %v183
    %v593 = vunpack.c.h.b16 %v183
    %v594 = vunpack.c.l.b16 %v184
    %v595 = vunpack.c.h.b16 %v184
    %v596 = vunpack.c.l.b16 %v185
    %v597 = vunpack.c.h.b16 %v185
    %v598 = vunpack.c.l.b16 %v186
    %v599 = vunpack.c.h.b16 %v186
    %v600 = vunpack.c.l.b16 %v187
    %v601 = vunpack.c.h.b16 %v187
    %v602 = vunpack.c.l.b16 %v188
    %v603 = vunpack.c.h.b16 %v188
    %v604 = vunpack.c.l.b16 %v189
    %v605 = vunpack.c.h.b16 %v189
    %v606 = vunpack.c.l.b16 %v190
    %v607 = vunpack.c.h.b16 %v190
    %v608 = vunpack.c.l.b16 %v191
    %v609 = vunpack.c.h.b16 %v191
    %v610 = vunpack.c.l.b16 %v192
    %v611 = vunpack.c.h.b16 %v192
    %v612 = vunpack.c.l.b16 %v193
    %v613 = vunpack.c.h.b16 %v193
    %v614 = vunpack.c.l.b16 %v194
    %v615 = vunpack.c.h.b16 %v194
    %v616 = vunpack.c.l.b16 %v195
    %v617 = vunpack.c.h.b16 %v195
    %v618 = vunpack.c.l.b16 %v196
    %v619 = vunpack.c.h.b16 %v196
    %v620 = vunpack.c.l.b16 %v197
    %v621 = vunpack.c.h.b16 %v197
    %v622 = vunpack.c.l.b16 %v198
    %v623 = vunpack.c.h.b16 %v198
    %v624 = vunpack.c.l.b16 %v199
    %v625 = vunpack.c.h.b16 %v199
    %v626 = vunpack.c.l.b16 %v200
    %v627 = vunpack.c.h.b16 %v200
    %v628 = vunpack.c.l.b16 %v201
    %v629 = vunpack.c.h.b16 %v201
    %v630 = vunpack.c.l.b16 %v202
    %v631 = vunpack.c.h.b16 %v202
    %v632 = vunpack.c.l.b16 %v203
    %v633 = vunpack.c.h.b16 %v203
    %v634 = vunpack.c.l.b16 %v204
    %v635 = vunpack.c.h.b16 %v204
    %v636 = vunpack.c.l.b16 %v205
    %v637 = vunpack.c.h.b16 %v205
    %v638 = vunpack.c.l.b16 %v206
    %v639 = vunpack.c.h.b16 %v206
    %v640 = vpack.c.b16 %v484, %v480
    %v641 = vpack.c.b16 %v485, %v481
    %v642 = vpack.c.b16 %v486, %v482
    %v643 = vpack.c.b16 %v487, %v483
    %v644 = vpack.c.b16 %v492, %v488
    %v645 = vpack.c.b16 %v493, %v489
    %v646 = vpack.c.b16 %v494, %v490
    %v647 = vpack.c.b16 %v495, %v491
    %v648 = vpack.c.b16 %v500, %v496
    %v649 = vpack.c.b16 %v501, %v497
    %v650 = vpack.c.b16 %v502, %v498
    %v651 = vpack.c.b16 %v503, %v499
    %v652 = vpack.c.b16 %v508, %v504
    %v653 = vpack.c.b16 %v509, %v505
    %v654 = vpack.c.b16 %v510, %v506
    %v655 = vpack.c.b16 %v511, %v507
    %v656 = vpack.c.b16 %v516, %v512
    %v657 = vpack.c.b16 %v517, %v513
    %v658 = vpack.c.b16 %v518, %v514
    %v659 = vpack.c.b16 %v519, %v515
    %v660 = vpack.c.b16 %v524, %v520
    %v661 = vpack.c.b16 %v525, %v521
    %v662 = vpack.c.b16 %v526, %v522
    %v663 = vpack.c.b16 %v527, %v523
    %v664 = vpack.c.b16 %v532, %v528
    %v665 = vpack.c.b16 %v533, %v529
    %v666 = vpack.c.b16 %v534, %v530
    %v667 = vpack.c.b16 %v535, %v531
    %v668 = vpack.c.b16 %v540, %v536
    %v669 = vpack.c.b16 %v541, %v537
    %v670 = vpack.c.b16 %v542, %v538
    %v671 = vpack.c.b16 %v543, %v539
    %v672 = vpack.c.b16 %v548, %v544
    %v673 = vpack.c.b16 %v549, %v545
    %v674 = vpack.c.b16 %v550, %v546
    %v675 = vpack.c.b16 %v551, %v547
    %v676 = vpack.c.b16 %v556, %v552
    %v677 = vpack.c.b16 %v557, %v553
    %v678 = vpack.c.b16 %v558, %v554
    %v679 = vpack.c.b16 %v559, %v555
    %v680 = vpack.c.b16 %v564, %v560
    %v681 = vpack.c.b16 %v565, %v561
    %v682 = vpack.c.b16 %v566, %v562
    %v683 = vpack.c.b16 %v567, %v563
    %v684 = vpack.c.b16 %v572, %v568
    %v685 = vpack.c.b16 %v573, %v569
    %v686 = vpack.c.b16 %v574, %v570
    %v687 = vpack.c.b16 %v575, %v571
    %v688 = vpack.c.b16 %v580, %v576
    %v689 = vpack.c.b16 %v581, %v577
    %v690 = vpack.c.b16 %v582, %v578
    %v691 = vpack.c.b16 %v583, %v579
    %v692 = vpack.c.b16 %v588, %v584
    %v693 = vpack.c.b16 %v589, %v585
    %v694 = vpack.c.b16 %v590, %v586
    %v695 = vpack.c.b16 %v591, %v587
    %v696 = vpack.c.b16 %v596, %v592
    %v697 = vpack.c.b16 %v597, %v593
    %v698 = vpack.c.b16 %v598, %v594
    %v699 = vpack.c.b16 %v599, %v595
    %v700 = vpack.c.b16 %v604, %v600
    %v701 = vpack.c.b16 %v605, %v601
    %v702 = vpack.c.b16 %v606, %v602
    %v703 = vpack.c.b16 %v607, %v603
    %v704 = vpack.c.b16 %v612, %v608
    %v705 = vpack.c.b16 %v613, %v609
    %v706 = vpack.c.b16 %v614, %v610
    %v707 = vpack.c.b16 %v615, %v611
    %v708 = vpack.c.b16 %v620, %v616
    %v709 = vpack.c.b16 %v621, %v617
    %v710 = vpack.c.b16 %v622, %v618
    %v711 = vpack.c.b16 %v623, %v619
    %v712 = vpack.c.b16 %v628, %v624
    %v713 = vpack.c.b16 %v629, %v625
    %v714 = vpack.c.b16 %v630, %v626
    %v715 = vpack.c.b16 %v631, %v627
    %v716 = vpack.c.b16 %v636, %v632
    %v717 = vpack.c.b16 %v637, %v633
    %v718 = vpack.c.b16 %v638, %v634
    %v719 = vpack.c.b16 %v639, %v635
    %vm800 = vcmask 523264
    %v802 = vsel %vm800, %v392, 0
    %v805 = vsel %vm800, %v395, 0
    %807 = vmatprep.subr.bf16.mxu0 %v641
    %808 = vmatpush1.bf16.msra.mxu0 %v640
    %809 = vmatprep.subr.bf16.mxu0 %v645
    %810 = vmatpush1.bf16.msra.mxu0 %v644
    %811 = vmatprep.subr.bf16.mxu0 %v649
    %812 = vmatpush1.bf16.msra.mxu0 %v648
    %813 = vmatprep.subr.bf16.mxu0 %v653
    %814 = vmatpush1.bf16.msra.mxu0 %v652
    %815 = vmatprep.subr.bf16.mxu0 %v657
    %816 = vmatpush1.bf16.msra.mxu0 %v656
    %817 = vmatprep.subr.bf16.mxu0 %v661
    %818 = vmatpush1.bf16.msra.mxu0 %v660
    %819 = vmatprep.subr.bf16.mxu0 %v665
    %820 = vmatpush1.bf16.msra.mxu0 %v664
    %821 = vmatprep.subr.bf16.mxu0 %v669
    %822 = vmatpush1.bf16.msra.mxu0 %v668
    %823 = vmatprep.subr.bf16.mxu0 %v673
    %824 = vmatpush1.bf16.msra.mxu0 %v672
    %825 = vmatprep.subr.bf16.mxu0 %v677
    %826 = vmatpush1.bf16.msra.mxu0 %v676
    %827 = vmatprep.subr.bf16.mxu0 %v681
    %828 = vmatpush1.bf16.msra.mxu0 %v680
    %829 = vmatprep.subr.bf16.mxu0 %v685
    %830 = vmatpush1.bf16.msra.mxu0 %v684
    %831 = vmatprep.subr.bf16.mxu0 %v689
    %832 = vmatpush1.bf16.msra.mxu0 %v688
    %833 = vmatprep.subr.bf16.mxu0 %v693
    %834 = vmatpush1.bf16.msra.mxu0 %v692
    %835 = vmatprep.subr.bf16.mxu0 %v697
    %836 = vmatpush1.bf16.msra.mxu0 %v696
    %837 = vmatprep.subr.bf16.mxu0 %v701
    %838 = vmatpush1.bf16.msra.mxu0 %v700
    %839 = vmatprep.mubr.bf16.mxu0 %v391
    %840 = vmatmul.mubr.bf16.gmra.mrb[0].mxu0 %v390
    %v841 = vpop.f32.mrb[0].mxu0
    %v842 = vadd.f32 %v299, %v841
    %v843 = vpop.f32.mrb[0].mxu0
    %v844 = vadd.f32 %v301, %v843
    %v845 = vpop.f32.mrb[0].mxu0
    %v846 = vadd.f32 %v303, %v845
    %v847 = vpop.f32.mrb[0].mxu0
    %v848 = vadd.f32 %v305, %v847
    %849 = vmatprep.mubr.bf16.mxu0 %v394
    %850 = vmatmul.mubr.bf16.gmra.mrb[0].mxu0 %v393
    %v851 = vpop.f32.mrb[0].mxu0
    %v852 = vadd.f32 %v309, %v851
    %v853 = vpop.f32.mrb[0].mxu0
    %v854 = vadd.f32 %v311, %v853
    %v855 = vpop.f32.mrb[0].mxu0
    %v856 = vadd.f32 %v313, %v855
    %v857 = vpop.f32.mrb[0].mxu0
    %v858 = vadd.f32 %v315, %v857
    %859 = vdwg.mxu0
    %860 = vmatprep.subr.bf16.mxu0 %v705
    %861 = vmatpush1.bf16.msra.mxu0 %v704
    %862 = vmatprep.subr.bf16.mxu0 %v709
    %863 = vmatpush1.bf16.msra.mxu0 %v708
    %864 = vmatprep.subr.bf16.mxu0 %v713
    %865 = vmatpush1.bf16.msra.mxu0 %v712
    %866 = vmatprep.subr.bf16.mxu0 %v717
    %867 = vmatpush1.bf16.msra.mxu0 %v716
    %868 = vmatprep.subr.bf16.mxu0 0
    %869 = vmatpush1.bf16.msra.mxu0 0
    %870 = vmatprep.subr.bf16.mxu0 0
    %871 = vmatpush1.bf16.msra.mxu0 0
    %872 = vmatprep.subr.bf16.mxu0 0
    %873 = vmatpush1.bf16.msra.mxu0 0
    %874 = vmatprep.subr.bf16.mxu0 0
    %875 = vmatpush1.bf16.msra.mxu0 0
    %876 = vmatprep.subr.bf16.mxu0 0
    %877 = vmatpush1.bf16.msra.mxu0 0
    %878 = vmatprep.subr.bf16.mxu0 0
    %879 = vmatpush1.bf16.msra.mxu0 0
    %880 = vmatprep.subr.bf16.mxu0 0
    %881 = vmatpush1.bf16.msra.mxu0 0
    %882 = vmatprep.subr.bf16.mxu0 0
    %883 = vmatpush1.bf16.msra.mxu0 0
    %884 = vmatprep.subr.bf16.mxu0 0
    %885 = vmatpush1.bf16.msra.mxu0 0
    %886 = vmatprep.subr.bf16.mxu0 0
    %887 = vmatpush1.bf16.msra.mxu0 0
    %888 = vmatprep.subr.bf16.mxu0 0
    %889 = vmatpush1.bf16.msra.mxu0 0
    %890 = vmatprep.subr.bf16.mxu0 0
    %891 = vmatpush1.bf16.msra.mxu0 0
    %892 = vmatprep.mubr.bf16.mxu0 0
    %893 = vmatmul.mubr.bf16.gmra.mrb[0].mxu0 %v802
    %v894 = vpop.f32.mrb[0].mxu0
    %v895 = vadd.f32 %v842, %v894
    %v896 = vpop.f32.mrb[0].mxu0
    %v897 = vadd.f32 %v844, %v896
    %v898 = vpop.f32.mrb[0].mxu0
    %v899 = vadd.f32 %v846, %v898
    %v900 = vpop.f32.mrb[0].mxu0
    %v901 = vadd.f32 %v848, %v900
    %902 = vmatprep.mubr.bf16.mxu0 0
    %903 = vmatmul.mubr.bf16.gmra.mrb[0].mxu0 %v805
    %v904 = vpop.f32.mrb[0].mxu0
    %v905 = vadd.f32 %v852, %v904
    %v906 = vpop.f32.mrb[0].mxu0
    %v907 = vadd.f32 %v854, %v906
    %v908 = vpop.f32.mrb[0].mxu0
    %v909 = vadd.f32 %v856, %v908
    %v910 = vpop.f32.mrb[0].mxu0
    %v911 = vadd.f32 %v858, %v910
    %912 = vdwg.mxu0
    %913 = vmatprep.subr.bf16.mxu0 %v643
    %914 = vmatpush1.bf16.msra.mxu0 %v642
    %915 = vmatprep.subr.bf16.mxu0 %v647
    %916 = vmatpush1.bf16.msra.mxu0 %v646
    %917 = vmatprep.subr.bf16.mxu0 %v651
    %918 = vmatpush1.bf16.msra.mxu0 %v650
    %919 = vmatprep.subr.bf16.mxu0 %v655
    %920 = vmatpush1.bf16.msra.mxu0 %v654
    %921 = vmatprep.subr.bf16.mxu0 %v659
    %922 = vmatpush1.bf16.msra.mxu0 %v658
    %923 = vmatprep.subr.bf16.mxu0 %v663
    %924 = vmatpush1.bf16.msra.mxu0 %v662
    %925 = vmatprep.subr.bf16.mxu0 %v667
    %926 = vmatpush1.bf16.msra.mxu0 %v666
    %927 = vmatprep.subr.bf16.mxu0 %v671
    %928 = vmatpush1.bf16.msra.mxu0 %v670
    %929 = vmatprep.subr.bf16.mxu0 %v675
    %930 = vmatpush1.bf16.msra.mxu0 %v674
    %931 = vmatprep.subr.bf16.mxu0 %v679
    %932 = vmatpush1.bf16.msra.mxu0 %v678
    %933 = vmatprep.subr.bf16.mxu0 %v683
    %934 = vmatpush1.bf16.msra.mxu0 %v682
    %935 = vmatprep.subr.bf16.mxu0 %v687
    %936 = vmatpush1.bf16.msra.mxu0 %v686
    %937 = vmatprep.subr.bf16.mxu0 %v691
    %938 = vmatpush1.bf16.msra.mxu0 %v690
    %939 = vmatprep.subr.bf16.mxu0 %v695
    %940 = vmatpush1.bf16.msra.mxu0 %v694
    %941 = vmatprep.subr.bf16.mxu0 %v699
    %942 = vmatpush1.bf16.msra.mxu0 %v698
    %943 = vmatprep.subr.bf16.mxu0 %v703
    %944 = vmatpush1.bf16.msra.mxu0 %v702
    %945 = vmatprep.mubr.bf16.mxu0 %v391
    %946 = vmatmul.mubr.bf16.gmra.mrb[0].mxu0 %v390
    %v947 = vpop.f32.mrb[0].mxu0
    %v948 = vadd.f32 %v352, %v947
    %v949 = vpop.f32.mrb[0].mxu0
    %v950 = vadd.f32 %v354, %v949
    %v951 = vpop.f32.mrb[0].mxu0
    %v952 = vadd.f32 %v356, %v951
    %v953 = vpop.f32.mrb[0].mxu0
    %v954 = vadd.f32 %v358, %v953
    %955 = vmatprep.mubr.bf16.mxu0 %v394
    %956 = vmatmul.mubr.bf16.gmra.mrb[0].mxu0 %v393
    %v957 = vpop.f32.mrb[0].mxu0
    %v958 = vadd.f32 %v362, %v957
    %v959 = vpop.f32.mrb[0].mxu0
    %v960 = vadd.f32 %v364, %v959
    %v961 = vpop.f32.mrb[0].mxu0
    %v962 = vadd.f32 %v366, %v961
    %v963 = vpop.f32.mrb[0].mxu0
    %v964 = vadd.f32 %v368, %v963
    %965 = vdwg.mxu0
    %966 = vmatprep.subr.bf16.mxu0 %v707
    %967 = vmatpush1.bf16.msra.mxu0 %v706
    %968 = vmatprep.subr.bf16.mxu0 %v711
    %969 = vmatpush1.bf16.msra.mxu0 %v710
    %970 = vmatprep.subr.bf16.mxu0 %v715
    %971 = vmatpush1.bf16.msra.mxu0 %v714
    %972 = vmatprep.subr.bf16.mxu0 %v719
    %973 = vmatpush1.bf16.msra.mxu0 %v718
    %974 = vmatprep.subr.bf16.mxu0 0
    %975 = vmatpush1.bf16.msra.mxu0 0
    %976 = vmatprep.subr.bf16.mxu0 0
    %977 = vmatpush1.bf16.msra.mxu0 0
    %978 = vmatprep.subr.bf16.mxu0 0
    %979 = vmatpush1.bf16.msra.mxu0 0
    %980 = vmatprep.subr.bf16.mxu0 0
    %981 = vmatpush1.bf16.msra.mxu0 0
    %982 = vmatprep.subr.bf16.mxu0 0
    %983 = vmatpush1.bf16.msra.mxu0 0
    %984 = vmatprep.subr.bf16.mxu0 0
    %985 = vmatpush1.bf16.msra.mxu0 0
    %986 = vmatprep.subr.bf16.mxu0 0
    %987 = vmatpush1.bf16.msra.mxu0 0
    %988 = vmatprep.subr.bf16.mxu0 0
    %989 = vmatpush1.bf16.msra.mxu0 0
    %990 = vmatprep.subr.bf16.mxu0 0
    %991 = vmatpush1.bf16.msra.mxu0 0
    %992 = vmatprep.subr.bf16.mxu0 0
    %993 = vmatpush1.bf16.msra.mxu0 0
    %994 = vmatprep.subr.bf16.mxu0 0
    %995 = vmatpush1.bf16.msra.mxu0 0
    %996 = vmatprep.subr.bf16.mxu0 0
    %997 = vmatpush1.bf16.msra.mxu0 0
    %998 = vmatprep.mubr.bf16.mxu0 0
    %999 = vmatmul.mubr.bf16.gmra.mrb[0].mxu0 %v802
    %v1000 = vpop.f32.mrb[0].mxu0
    %v1001 = vadd.f32 %v948, %v1000
    %v1002 = vpop.f32.mrb[0].mxu0
    %v1003 = vadd.f32 %v950, %v1002
    %v1004 = vpop.f32.mrb[0].mxu0
    %v1005 = vadd.f32 %v952, %v1004
    %v1006 = vpop.f32.mrb[0].mxu0
    %v1007 = vadd.f32 %v954, %v1006
    %1008 = vmatprep.mubr.bf16.mxu0 0
    %1009 = vmatmul.mubr.bf16.gmra.mrb[0].mxu0 %v805
    %v1010 = vpop.f32.mrb[0].mxu0
    %v1011 = vadd.f32 %v958, %v1010
    %v1012 = vpop.f32.mrb[0].mxu0
    %v1013 = vadd.f32 %v960, %v1012
    %v1014 = vpop.f32.mrb[0].mxu0
    %v1015 = vadd.f32 %v962, %v1014
    %v1016 = vpop.f32.mrb[0].mxu0
    %v1017 = vadd.f32 %v964, %v1016
    %1018 = vdwg.mxu0
    %v1019 = vpack.c.bf16 %v899, %v895
    %v1020 = vpack.c.bf16 %v901, %v897
    %v1021 = vpack.c.bf16 %v1005, %v1001
    %v1022 = vpack.c.bf16 %v1007, %v1003
    %v1023 = vpack.c.bf16 %v909, %v905
    %v1024 = vpack.c.bf16 %v911, %v907
    %v1025 = vpack.c.bf16 %v1015, %v1011
    %v1026 = vpack.c.bf16 %v1017, %v1013
    %v1027 = vld [vmem:[%s2] sm:$0xf]
    %v1028 = vld [vmem:[%s2 + $0x4] sm:$0xf]
    %v1029 = vld [vmem:[%s6] sm:$0xff]
    %v1030 = vld [vmem:[%s6 + $0x8] sm:$0xff]
    %v1031 = vld [vmem:[%s6 + $0x10] sm:$0xff]
    %v1032 = vld [vmem:[%s6 + $0x18] sm:$0x11]
    %v1035 = vunpack.c.l.b16 %v1027
    %v1036 = vunpack.c.l.b16 %v1028
    %v1037 = vpack.c.b16 %v1036, %v1035
    %v1042 = vunpack.c.l.b16 %v1029
    %v1043 = vunpack.c.h.b16 %v1029
    %v1044 = vunpack.c.l.b16 %v1030
    %v1045 = vunpack.c.h.b16 %v1030
    %v1046 = vunpack.c.l.b16 %v1031
    %v1047 = vunpack.c.h.b16 %v1031
    %v1048 = vunpack.c.l.b16 %v1032
    %v1049 = vunpack.c.h.b16 %v1032
    %v1050 = vpack.c.b16 %v1044, %v1042
    %v1051 = vpack.c.b16 %v1045, %v1043
    %v1052 = vpack.c.b16 %v1048, %v1046
    %v1053 = vpack.c.b16 %v1049, %v1047
    %vm1056 = vcmask 203776
    %v1058 = vsel %vm1056, %v1037, 0
    %vm1060 = vcmask 1043456
    %vm1061 = vcmask 1044480
    %v1062 = vsel %vm1060, 4294967295, 65535
    %v1063 = vsel %vm1061, %v1062, 0
    %v1065 = vand.u32 %v1052, %v1063
    %v1068 = vand.u32 %v1053, %v1063
    %1070 = vmatprep.subr.bf16.mxu0 %v1051
    %1071 = vmatpush1.bf16.msra.mxu0 %v1050
    %1072 = vmatprep.subr.bf16.mxu0 %v1068
    %1073 = vmatpush1.bf16.msra.mxu0 %v1065
    %1074 = vmatprep.subr.bf16.mxu0 0
    %1075 = vmatpush1.bf16.msra.mxu0 0
    %1076 = vmatprep.subr.bf16.mxu0 0
    %1077 = vmatpush1.bf16.msra.mxu0 0
    %1078 = vmatprep.subr.bf16.mxu0 0
    %1079 = vmatpush1.bf16.msra.mxu0 0
    %1080 = vmatprep.subr.bf16.mxu0 0
    %1081 = vmatpush1.bf16.msra.mxu0 0
    %1082 = vmatprep.subr.bf16.mxu0 0
    %1083 = vmatpush1.bf16.msra.mxu0 0
    %1084 = vmatprep.subr.bf16.mxu0 0
    %1085 = vmatpush1.bf16.msra.mxu0 0
    %1086 = vmatprep.subr.bf16.mxu0 0
    %1087 = vmatpush1.bf16.msra.mxu0 0
    %1088 = vmatprep.subr.bf16.mxu0 0
    %1089 = vmatpush1.bf16.msra.mxu0 0
    %1090 = vmatprep.subr.bf16.mxu0 0
    %1091 = vmatpush1.bf16.msra.mxu0 0
    %1092 = vmatprep.subr.bf16.mxu0 0
    %1093 = vmatpush1.bf16.msra.mxu0 0
    %1094 = vmatprep.subr.bf16.mxu0 0
    %1095 = vmatpush1.bf16.msra.mxu0 0
    %1096 = vmatprep.subr.bf16.mxu0 0
    %1097 = vmatpush1.bf16.msra.mxu0 0
    %1098 = vmatprep.subr.bf16.mxu0 0
    %1099 = vmatpush1.bf16.msra.mxu0 0
    %1100 = vmatprep.subr.bf16.mxu0 0
    %1101 = vmatpush1.bf16.msra.mxu0 0
    %1102 = vmatprep.mubr.bf16.mxu0 0
    %1103 = vmatmul.mubr.bf16.gmra.mrb[0].mxu0 %v1058
    %v1104 = vpop.f32.mrb[0].mxu0
    %v1105 = vadd.f32 0.0, %v1104
    %v1106 = vpop.f32.mrb[0].mxu0
    %v1107 = vadd.f32 0.0, %v1106
    %v1108 = vpop.f32.mrb[0].mxu0
    %v1109 = vadd.f32 0.0, %v1108
    %v1110 = vpop.f32.mrb[0].mxu0
    %v1111 = vadd.f32 0.0, %v1110
    %1112 = vdwg.mxu0
    %v1113 = vpack.c.bf16 %v1109, %v1105
    %v1114 = vpack.c.bf16 %v1111, %v1107
    %v1115 = vld [vmem:[%s7] sm:$0xff]
    %v1116 = vld [vmem:[%s7 + $0x8] sm:$0xff]
    %v1117 = vld [vmem:[%s7 + $0x10] sm:$0xff]
    %v1118 = vld [vmem:[%s7 + $0x18] sm:$0xff]
    %v1119 = vld [vmem:[%s7 + $0x20] sm:$0xff]
    %v1120 = vld [vmem:[%s7 + $0x28] sm:$0xff]
    %v1121 = vld [vmem:[%s7 + $0x30] sm:$0xff]
    %v1122 = vld [vmem:[%s7 + $0x38] sm:$0xff]
    %v1123 = vld [vmem:[%s7 + $0x40] sm:$0xff]
    %v1124 = vld [vmem:[%s7 + $0x48] sm:$0xff]
    %v1125 = vld [vmem:[%s7 + $0x50] sm:$0xff]
    %v1126 = vld [vmem:[%s7 + $0x58] sm:$0xff]
    %v1127 = vld [vmem:[%s7 + $0x60] sm:$0xff]
    %v1128 = vld [vmem:[%s7 + $0x68] sm:$0xff]
    %v1129 = vld [vmem:[%s7 + $0x70] sm:$0xff]
    %v1130 = vld [vmem:[%s7 + $0x78] sm:$0xff]
    %v1131 = vld [vmem:[%s7 + $0x80] sm:$0xff]
    %v1132 = vld [vmem:[%s7 + $0x88] sm:$0xff]
    %v1133 = vld [vmem:[%s7 + $0x90] sm:$0xff]
    %v1134 = vld [vmem:[%s7 + $0x98] sm:$0xff]
    %v1135 = vld [vmem:[%s7 + $0xa0] sm:$0xff]
    %v1136 = vld [vmem:[%s7 + $0xa8] sm:$0xff]
    %v1137 = vld [vmem:[%s7 + $0xb0] sm:$0xff]
    %v1138 = vld [vmem:[%s7 + $0xb8] sm:$0xff]
    %v1139 = vld [vmem:[%s7 + $0xc0] sm:$0xff]
    %v1140 = vld [vmem:[%s7 + $0xc8] sm:$0xff]
    %v1141 = vld [vmem:[%s7 + $0xd0] sm:$0xff]
    %v1142 = vld [vmem:[%s7 + $0xd8] sm:$0xff]
    %v1143 = vld [vmem:[%s7 + $0xe0] sm:$0xff]
    %v1144 = vld [vmem:[%s7 + $0xe8] sm:$0xff]
    %v1145 = vld [vmem:[%s7 + $0xf0] sm:$0xff]
    %v1146 = vld [vmem:[%s7 + $0xf8] sm:$0xff]
    %v1147 = vld [vmem:[%s7 + $0x100] sm:$0xff]
    %v1148 = vld [vmem:[%s7 + $0x108] sm:$0xff]
    %v1149 = vld [vmem:[%s7 + $0x110] sm:$0xff]
    %v1150 = vld [vmem:[%s7 + $0x118] sm:$0xff]
    %v1151 = vld [vmem:[%s7 + $0x120] sm:$0xff]
    %v1152 = vld [vmem:[%s7 + $0x128] sm:$0xff]
    %v1153 = vld [vmem:[%s7 + $0x130] sm:$0xff]
    %v1154 = vld [vmem:[%s7 + $0x138] sm:$0xff]
    %v1155 = vld [vmem:[%s7 + $0x140] sm:$0xff]
    %v1156 = vld [vmem:[%s7 + $0x148] sm:$0xff]
    %v1157 = vld [vmem:[%s7 + $0x150] sm:$0xff]
    %v1158 = vld [vmem:[%s7 + $0x158] sm:$0xff]
    %v1159 = vld [vmem:[%s7 + $0x160] sm:$0xff]
    %v1160 = vld [vmem:[%s7 + $0x168] sm:$0xff]
    %v1161 = vld [vmem:[%s7 + $0x170] sm:$0xff]
    %v1162 = vld [vmem:[%s7 + $0x178] sm:$0xff]
    %v1163 = vld [vmem:[%s7 + $0x180] sm:$0xff]
    %v1164 = vld [vmem:[%s7 + $0x188] sm:$0xff]
    %v1165 = vld [vmem:[%s7 + $0x190] sm:$0xff]
    %v1166 = vld [vmem:[%s7 + $0x198] sm:$0xff]
    %v1167 = vld [vmem:[%s7 + $0x1a0] sm:$0xff]
    %v1168 = vld [vmem:[%s7 + $0x1a8] sm:$0xff]
    %v1169 = vld [vmem:[%s7 + $0x1b0] sm:$0xff]
    %v1170 = vld [vmem:[%s7 + $0x1b8] sm:$0xff]
    %v1171 = vld [vmem:[%s7 + $0x1c0] sm:$0xff]
    %v1172 = vld [vmem:[%s7 + $0x1c8] sm:$0xff]
    %v1173 = vld [vmem:[%s7 + $0x1d0] sm:$0xff]
    %v1174 = vld [vmem:[%s7 + $0x1d8] sm:$0xff]
    %v1175 = vld [vmem:[%s7 + $0x1e0] sm:$0xff]
    %v1176 = vld [vmem:[%s7 + $0x1e8] sm:$0xff]
    %v1177 = vld [vmem:[%s7 + $0x1f0] sm:$0x33]
    %v1178 = vld [vmem:[%s8] sm:$0xff]
    %v1179 = vld [vmem:[%s8 + $0x8] sm:$0xff]
    %v1180 = vld [vmem:[%s8 + $0x10] sm:$0xff]
    %v1181 = vld [vmem:[%s8 + $0x18] sm:$0xff]
    %v1182 = vld [vmem:[%s8 + $0x20] sm:$0xff]
    %v1183 = vld [vmem:[%s8 + $0x28] sm:$0xff]
    %v1184 = vld [vmem:[%s8 + $0x30] sm:$0xff]
    %v1185 = vld [vmem:[%s8 + $0x38] sm:$0xff]
    %v1186 = vld [vmem:[%s8 + $0x40] sm:$0xff]
    %v1187 = vld [vmem:[%s8 + $0x48] sm:$0xff]
    %v1188 = vld [vmem:[%s8 + $0x50] sm:$0xff]
    %v1189 = vld [vmem:[%s8 + $0x58] sm:$0xff]
    %v1190 = vld [vmem:[%s8 + $0x60] sm:$0xff]
    %v1191 = vld [vmem:[%s8 + $0x68] sm:$0xff]
    %v1192 = vld [vmem:[%s8 + $0x70] sm:$0xff]
    %v1193 = vld [vmem:[%s8 + $0x78] sm:$0xff]
    %v1194 = vld [vmem:[%s8 + $0x80] sm:$0xff]
    %v1195 = vld [vmem:[%s8 + $0x88] sm:$0xff]
    %v1196 = vld [vmem:[%s8 + $0x90] sm:$0xff]
    %v1197 = vld [vmem:[%s8 + $0x98] sm:$0xff]
    %v1198 = vld [vmem:[%s8 + $0xa0] sm:$0xff]
    %v1199 = vld [vmem:[%s8 + $0xa8] sm:$0xff]
    %v1200 = vld [vmem:[%s8 + $0xb0] sm:$0xff]
    %v1201 = vld [vmem:[%s8 + $0xb8] sm:$0xff]
    %v1202 = vld [vmem:[%s8 + $0xc0] sm:$0xff]
    %v1228 = vunpack.c.l.b16 %v1178
    %v1229 = vunpack.c.h.b16 %v1178
    %v1230 = vunpack.c.l.b16 %v1179
    %v1231 = vunpack.c.h.b16 %v1179
    %v1232 = vunpack.c.l.b16 %v1180
    %v1233 = vunpack.c.h.b16 %v1180
    %v1234 = vunpack.c.l.b16 %v1181
    %v1235 = vunpack.c.h.b16 %v1181
    %v1236 = vunpack.c.l.b16 %v1182
    %v1237 = vunpack.c.h.b16 %v1182
    %v1238 = vunpack.c.l.b16 %v1183
    %v1239 = vunpack.c.h.b16 %v1183
    %v1240 = vunpack.c.l.b16 %v1184
    %v1241 = vunpack.c.h.b16 %v1184
    %v1242 = vunpack.c.l.b16 %v1185
    %v1243 = vunpack.c.h.b16 %v1185
    %v1244 = vunpack.c.l.b16 %v1186
    %v1245 = vunpack.c.h.b16 %v1186
    %v1246 = vunpack.c.l.b16 %v1187
    %v1247 = vunpack.c.h.b16 %v1187
    %v1248 = vunpack.c.l.b16 %v1188
    %v1249 = vunpack.c.h.b16 %v1188
    %v1250 = vunpack.c.l.b16 %v1189
    %v1251 = vunpack.c.h.b16 %v1189
    %v1252 = vunpack.c.l.b16 %v1190
    %v1253 = vunpack.c.h.b16 %v1190
    %v1254 = vunpack.c.l.b16 %v1191
    %v1255 = vunpack.c.h.b16 %v1191
    %v1256 = vunpack.c.l.b16 %v1192
    %v1257 = vunpack.c.h.b16 %v1192
    %v1258 = vunpack.c.l.b16 %v1193
    %v1259 = vunpack.c.h.b16 %v1193
    %v1260 = vunpack.c.l.b16 %v1194
    %v1261 = vunpack.c.h.b16 %v1194
    %v1262 = vunpack.c.l.b16 %v1195
    %v1263 = vunpack.c.h.b16 %v1195
    %v1264 = vunpack.c.l.b16 %v1196
    %v1265 = vunpack.c.h.b16 %v1196
    %v1266 = vunpack.c.l.b16 %v1197
    %v1267 = vunpack.c.h.b16 %v1197
    %v1268 = vunpack.c.l.b16 %v1198
    %v1269 = vunpack.c.h.b16 %v1198
    %v1270 = vunpack.c.l.b16 %v1199
    %v1271 = vunpack.c.h.b16 %v1199
    %v1272 = vunpack.c.l.b16 %v1200
    %v1273 = vunpack.c.h.b16 %v1200
    %v1274 = vunpack.c.l.b16 %v1201
    %v1275 = vunpack.c.h.b16 %v1201
    %v1276 = vunpack.c.l.b16 %v1202
    %v1277 = vunpack.c.h.b16 %v1202
    %v1278 = vpack.c.b16 %v1230, %v1228
    %v1279 = vpack.c.b16 %v1231, %v1229
    %v1280 = vpack.c.b16 %v1234, %v1232
    %v1281 = vpack.c.b16 %v1235, %v1233
    %v1282 = vpack.c.b16 %v1238, %v1236
    %v1283 = vpack.c.b16 %v1239, %v1237
    %v1284 = vpack.c.b16 %v1242, %v1240
    %v1285 = vpack.c.b16 %v1243, %v1241
    %v1286 = vpack.c.b16 %v1246, %v1244
    %v1287 = vpack.c.b16 %v1247, %v1245
    %v1288 = vpack.c.b16 %v1250, %v1248
    %v1289 = vpack.c.b16 %v1251, %v1249
    %v1290 = vpack.c.b16 %v1254, %v1252
    %v1291 = vpack.c.b16 %v1255, %v1253
    %v1292 = vpack.c.b16 %v1258, %v1256
    %v1293 = vpack.c.b16 %v1259, %v1257
    %v1294 = vpack.c.b16 %v1262, %v1260
    %v1295 = vpack.c.b16 %v1263, %v1261
    %v1296 = vpack.c.b16 %v1266, %v1264
    %v1297 = vpack.c.b16 %v1267, %v1265
    %v1298 = vpack.c.b16 %v1270, %v1268
    %v1299 = vpack.c.b16 %v1271, %v1269
    %v1300 = vpack.c.b16 %v1274, %v1272
    %v1301 = vpack.c.b16 %v1275, %v1273
    %v1302 = vpack.c.b16 %v1276, %v1276
    %v1303 = vpack.c.b16 %v1277, %v1277
    %vm1328 = vcmask 588800
    %v1330 = vsel %vm1328, %v1114, 0
    %v1333 = vsel %vm1060, %v1302, 0
    %v1336 = vsel %vm1060, %v1303, 0
    %1338 = vmatprep.subr.bf16.mxu0 %v1279
    %1339 = vmatpush1.bf16.msra.mxu0 %v1278
    %1340 = vmatprep.subr.bf16.mxu0 %v1281
    %1341 = vmatpush1.bf16.msra.mxu0 %v1280
    %1342 = vmatprep.subr.bf16.mxu0 %v1283
    %1343 = vmatpush1.bf16.msra.mxu0 %v1282
    %1344 = vmatprep.subr.bf16.mxu0 %v1285
    %1345 = vmatpush1.bf16.msra.mxu0 %v1284
    %1346 = vmatprep.subr.bf16.mxu0 %v1287
    %1347 = vmatpush1.bf16.msra.mxu0 %v1286
    %1348 = vmatprep.subr.bf16.mxu0 %v1289
    %1349 = vmatpush1.bf16.msra.mxu0 %v1288
    %1350 = vmatprep.subr.bf16.mxu0 %v1291
    %1351 = vmatpush1.bf16.msra.mxu0 %v1290
    %1352 = vmatprep.subr.bf16.mxu0 %v1293
    %1353 = vmatpush1.bf16.msra.mxu0 %v1292
    %1354 = vmatprep.subr.bf16.mxu0 %v1295
    %1355 = vmatpush1.bf16.msra.mxu0 %v1294
    %1356 = vmatprep.subr.bf16.mxu0 %v1297
    %1357 = vmatpush1.bf16.msra.mxu0 %v1296
    %1358 = vmatprep.subr.bf16.mxu0 %v1299
    %1359 = vmatpush1.bf16.msra.mxu0 %v1298
    %1360 = vmatprep.subr.bf16.mxu0 %v1301
    %1361 = vmatpush1.bf16.msra.mxu0 %v1300
    %1362 = vmatprep.subr.bf16.mxu0 %v1336
    %1363 = vmatpush1.bf16.msra.mxu0 %v1333
    %1364 = vmatprep.subr.bf16.mxu0 0
    %1365 = vmatpush1.bf16.msra.mxu0 0
    %1366 = vmatprep.subr.bf16.mxu0 0
    %1367 = vmatpush1.bf16.msra.mxu0 0
    %1368 = vmatprep.subr.bf16.mxu0 0
    %1369 = vmatpush1.bf16.msra.mxu0 0
    %1370 = vmatprep.mubr.bf16.mxu0 %v1330
    %1371 = vmatmul.mubr.bf16.gmra.mrb[0].mxu0 %v1113
    %v1372 = vpop.f32.mrb[0].mxu0
    %v1373 = vadd.f32 0.0, %v1372
    %v1374 = vpop.f32.mrb[0].mxu0
    %v1375 = vadd.f32 0.0, %v1374
    %v1376 = vpop.f32.mrb[0].mxu0
    %v1377 = vadd.f32 0.0, %v1376
    %v1378 = vpop.f32.mrb[0].mxu0
    %v1379 = vadd.f32 0.0, %v1378
    %1380 = vdwg.mxu0
    %v1444 = vunpack.c.l.b16 %v1115
    %v1445 = vunpack.c.h.b16 %v1115
    %v1446 = vunpack.c.l.b16 %v1116
    %v1447 = vunpack.c.h.b16 %v1116
    %v1448 = vunpack.c.l.b16 %v1117
    %v1449 = vunpack.c.h.b16 %v1117
    %v1450 = vunpack.c.l.b16 %v1118
    %v1451 = vunpack.c.h.b16 %v1118
    %v1452 = vunpack.c.l.b16 %v1119
    %v1453 = vunpack.c.h.b16 %v1119
    %v1454 = vunpack.c.l.b16 %v1120
    %v1455 = vunpack.c.h.b16 %v1120
    %v1456 = vunpack.c.l.b16 %v1121
    %v1457 = vunpack.c.h.b16 %v1121
    %v1458 = vunpack.c.l.b16 %v1122
    %v1459 = vunpack.c.h.b16 %v1122
    %v1460 = vunpack.c.l.b16 %v1123
    %v1461 = vunpack.c.h.b16 %v1123
    %v1462 = vunpack.c.l.b16 %v1124
    %v1463 = vunpack.c.h.b16 %v1124
    %v1464 = vunpack.c.l.b16 %v1125
    %v1465 = vunpack.c.h.b16 %v1125
    %v1466 = vunpack.c.l.b16 %v1126
    %v1467 = vunpack.c.h.b16 %v1126
    %v1468 = vunpack.c.l.b16 %v1127
    %v1469 = vunpack.c.h.b16 %v1127
    %v1470 = vunpack.c.l.b16 %v1128
    %v1471 = vunpack.c.h.b16 %v1128
    %v1472 = vunpack.c.l.b16 %v1129
    %v1473 = vunpack.c.h.b16 %v1129
    %v1474 = vunpack.c.l.b16 %v1130
    %v1475 = vunpack.c.h.b16 %v1130
    %v1476 = vunpack.c.l.b16 %v1131
    %v1477 = vunpack.c.h.b16 %v1131
    %v1478 = vunpack.c.l.b16 %v1132
    %v1479 = vunpack.c.h.b16 %v1132
    %v1480 = vunpack.c.l.b16 %v1133
    %v1481 = vunpack.c.h.b16 %v1133
    %v1482 = vunpack.c.l.b16 %v1134
    %v1483 = vunpack.c.h.b16 %v1134
    %v1484 = vunpack.c.l.b16 %v1135
    %v1485 = vunpack.c.h.b16 %v1135
    %v1486 = vunpack.c.l.b16 %v1136
    %v1487 = vunpack.c.h.b16 %v1136
    %v1488 = vunpack.c.l.b16 %v1137
    %v1489 = vunpack.c.h.b16 %v1137
    %v1490 = vunpack.c.l.b16 %v1138
    %v1491 = vunpack.c.h.b16 %v1138
    %v1492 = vunpack.c.l.b16 %v1139
    %v1493 = vunpack.c.h.b16 %v1139
    %v1494 = vunpack.c.l.b16 %v1140
    %v1495 = vunpack.c.h.b16 %v1140
    %v1496 = vunpack.c.l.b16 %v1141
    %v1497 = vunpack.c.h.b16 %v1141
    %v1498 = vunpack.c.l.b16 %v1142
    %v1499 = vunpack.c.h.b16 %v1142
    %v1500 = vunpack.c.l.b16 %v1143
    %v1501 = vunpack.c.h.b16 %v1143
    %v1502 = vunpack.c.l.b16 %v1144
    %v1503 = vunpack.c.h.b16 %v1144
    %v1504 = vunpack.c.l.b16 %v1145
    %v1505 = vunpack.c.h.b16 %v1145
    %v1506 = vunpack.c.l.b16 %v1146
    %v1507 = vunpack.c.h.b16 %v1146
    %v1508 = vunpack.c.l.b16 %v1147
    %v1509 = vunpack.c.h.b16 %v1147
    %v1510 = vunpack.c.l.b16 %v1148
    %v1511 = vunpack.c.h.b16 %v1148
    %v1512 = vunpack.c.l.b16 %v1149
    %v1513 = vunpack.c.h.b16 %v1149
    %v1514 = vunpack.c.l.b16 %v1150
    %v1515 = vunpack.c.h.b16 %v1150
    %v1516 = vunpack.c.l.b16 %v1151
    %v1517 = vunpack.c.h.b16 %v1151
    %v1518 = vunpack.c.l.b16 %v1152
    %v1519 = vunpack.c.h.b16 %v1152
    %v1520 = vunpack.c.l.b16 %v1153
    %v1521 = vunpack.c.h.b16 %v1153
    %v1522 = vunpack.c.l.b16 %v1154
    %v1523 = vunpack.c.h.b16 %v1154
    %v1524 = vunpack.c.l.b16 %v1155
    %v1525 = vunpack.c.h.b16 %v1155
    %v1526 = vunpack.c.l.b16 %v1156
    %v1527 = vunpack.c.h.b16 %v1156
    %v1528 = vunpack.c.l.b16 %v1157
    %v1529 = vunpack.c.h.b16 %v1157
    %v1530 = vunpack.c.l.b16 %v1158
    %v1531 = vunpack.c.h.b16 %v1158
    %v1532 = vunpack.c.l.b16 %v1159
    %v1533 = vunpack.c.h.b16 %v1159
    %v1534 = vunpack.c.l.b16 %v1160
    %v1535 = vunpack.c.h.b16 %v1160
    %v1536 = vunpack.c.l.b16 %v1161
    %v1537 = vunpack.c.h.b16 %v1161
    %v1538 = vunpack.c.l.b16 %v1162
    %v1539 = vunpack.c.h.b16 %v1162
    %v1540 = vunpack.c.l.b16 %v1163
    %v1541 = vunpack.c.h.b16 %v1163
    %v1542 = vunpack.c.l.b16 %v1164
    %v1543 = vunpack.c.h.b16 %v1164
    %v1544 = vunpack.c.l.b16 %v1165
    %v1545 = vunpack.c.h.b16 %v1165
    %v1546 = vunpack.c.l.b16 %v1166
    %v1547 = vunpack.c.h.b16 %v1166
    %v1548 = vunpack.c.l.b16 %v1167
    %v1549 = vunpack.c.h.b16 %v1167
    %v1550 = vunpack.c.l.b16 %v1168
    %v1551 = vunpack.c.h.b16 %v1168
    %v1552 = vunpack.c.l.b16 %v1169
    %v1553 = vunpack.c.h.b16 %v1169
    %v1554 = vunpack.c.l.b16 %v1170
    %v1555 = vunpack.c.h.b16 %v1170
    %v1556 = vunpack.c.l.b16 %v1171
    %v1557 = vunpack.c.h.b16 %v1171
    %v1558 = vunpack.c.l.b16 %v1172
    %v1559 = vunpack.c.h.b16 %v1172
    %v1560 = vunpack.c.l.b16 %v1173
    %v1561 = vunpack.c.h.b16 %v1173
    %v1562 = vunpack.c.l.b16 %v1174
    %v1563 = vunpack.c.h.b16 %v1174
    %v1564 = vunpack.c.l.b16 %v1175
    %v1565 = vunpack.c.h.b16 %v1175
    %v1566 = vunpack.c.l.b16 %v1176
    %v1567 = vunpack.c.h.b16 %v1176
    %v1568 = vunpack.c.l.b16 %v1177
    %v1569 = vunpack.c.h.b16 %v1177
    %v1570 = vpack.c.b16 %v1446, %v1444
    %v1571 = vpack.c.b16 %v1447, %v1445
    %v1572 = vpack.c.b16 %v1450, %v1448
    %v1573 = vpack.c.b16 %v1451, %v1449
    %v1574 = vpack.c.b16 %v1454, %v1452
    %v1575 = vpack.c.b16 %v1455, %v1453
    %v1576 = vpack.c.b16 %v1458, %v1456
    %v1577 = vpack.c.b16 %v1459, %v1457
    %v1578 = vpack.c.b16 %v1462, %v1460
    %v1579 = vpack.c.b16 %v1463, %v1461
    %v1580 = vpack.c.b16 %v1466, %v1464
    %v1581 = vpack.c.b16 %v1467, %v1465
    %v1582 = vpack.c.b16 %v1470, %v1468
    %v1583 = vpack.c.b16 %v1471, %v1469
    %v1584 = vpack.c.b16 %v1474, %v1472
    %v1585 = vpack.c.b16 %v1475, %v1473
    %v1586 = vpack.c.b16 %v1478, %v1476
    %v1587 = vpack.c.b16 %v1479, %v1477
    %v1588 = vpack.c.b16 %v1482, %v1480
    %v1589 = vpack.c.b16 %v1483, %v1481
    %v1590 = vpack.c.b16 %v1486, %v1484
    %v1591 = vpack.c.b16 %v1487, %v1485
    %v1592 = vpack.c.b16 %v1490, %v1488
    %v1593 = vpack.c.b16 %v1491, %v1489
    %v1594 = vpack.c.b16 %v1494, %v1492
    %v1595 = vpack.c.b16 %v1495, %v1493
    %v1596 = vpack.c.b16 %v1498, %v1496
    %v1597 = vpack.c.b16 %v1499, %v1497
    %v1598 = vpack.c.b16 %v1502, %v1500
    %v1599 = vpack.c.b16 %v1503, %v1501
    %v1600 = vpack.c.b16 %v1506, %v1504
    %v1601 = vpack.c.b16 %v1507, %v1505
    %v1602 = vpack.c.b16 %v1510, %v1508
    %v1603 = vpack.c.b16 %v1511, %v1509
    %v1604 = vpack.c.b16 %v1514, %v1512
    %v1605 = vpack.c.b16 %v1515, %v1513
    %v1606 = vpack.c.b16 %v1518, %v1516
    %v1607 = vpack.c.b16 %v1519, %v1517
    %v1608 = vpack.c.b16 %v1522, %v1520
    %v1609 = vpack.c.b16 %v1523, %v1521
    %v1610 = vpack.c.b16 %v1526, %v1524
    %v1611 = vpack.c.b16 %v1527, %v1525
    %v1612 = vpack.c.b16 %v1530, %v1528
    %v1613 = vpack.c.b16 %v1531, %v1529
    %v1614 = vpack.c.b16 %v1534, %v1532
    %v1615 = vpack.c.b16 %v1535, %v1533
    %v1616 = vpack.c.b16 %v1538, %v1536
    %v1617 = vpack.c.b16 %v1539, %v1537
    %v1618 = vpack.c.b16 %v1542, %v1540
    %v1619 = vpack.c.b16 %v1543, %v1541
    %v1620 = vpack.c.b16 %v1546, %v1544
    %v1621 = vpack.c.b16 %v1547, %v1545
    %v1622 = vpack.c.b16 %v1550, %v1548
    %v1623 = vpack.c.b16 %v1551, %v1549
    %v1624 = vpack.c.b16 %v1554, %v1552
    %v1625 = vpack.c.b16 %v1555, %v1553
    %v1626 = vpack.c.b16 %v1558, %v1556
    %v1627 = vpack.c.b16 %v1559, %v1557
    %v1628 = vpack.c.b16 %v1562, %v1560
    %v1629 = vpack.c.b16 %v1563, %v1561
    %v1630 = vpack.c.b16 %v1566, %v1564
    %v1631 = vpack.c.b16 %v1567, %v1565
    %v1632 = vpack.c.b16 %v1568, %v1568
    %v1633 = vpack.c.b16 %v1569, %v1569
    %vm1696 = vcmask 949248
    %v1698 = vsel %vm1696, %v1022, 0
    %v1701 = vsel %vm62, %v1632, 0
    %v1704 = vsel %vm62, %v1633, 0
    %1706 = vmatprep.subr.bf16.mxu0 %v1571
    %1707 = vmatpush1.bf16.msra.mxu0 %v1570
    %1708 = vmatprep.subr.bf16.mxu0 %v1573
    %1709 = vmatpush1.bf16.msra.mxu0 %v1572
    %1710 = vmatprep.subr.bf16.mxu0 %v1575
    %1711 = vmatpush1.bf16.msra.mxu0 %v1574
    %1712 = vmatprep.subr.bf16.mxu0 %v1577
    %1713 = vmatpush1.bf16.msra.mxu0 %v1576
    %1714 = vmatprep.subr.bf16.mxu0 %v1579
    %1715 = vmatpush1.bf16.msra.mxu0 %v1578
    %1716 = vmatprep.subr.bf16.mxu0 %v1581
    %1717 = vmatpush1.bf16.msra.mxu0 %v1580
    %1718 = vmatprep.subr.bf16.mxu0 %v1583
    %1719 = vmatpush1.bf16.msra.mxu0 %v1582
    %1720 = vmatprep.subr.bf16.mxu0 %v1585
    %1721 = vmatpush1.bf16.msra.mxu0 %v1584
    %1722 = vmatprep.subr.bf16.mxu0 %v1587
    %1723 = vmatpush1.bf16.msra.mxu0 %v1586
    %1724 = vmatprep.subr.bf16.mxu0 %v1589
    %1725 = vmatpush1.bf16.msra.mxu0 %v1588
    %1726 = vmatprep.subr.bf16.mxu0 %v1591
    %1727 = vmatpush1.bf16.msra.mxu0 %v1590
    %1728 = vmatprep.subr.bf16.mxu0 %v1593
    %1729 = vmatpush1.bf16.msra.mxu0 %v1592
    %1730 = vmatprep.subr.bf16.mxu0 %v1595
    %1731 = vmatpush1.bf16.msra.mxu0 %v1594
    %1732 = vmatprep.subr.bf16.mxu0 %v1597
    %1733 = vmatpush1.bf16.msra.mxu0 %v1596
    %1734 = vmatprep.subr.bf16.mxu0 %v1599
    %1735 = vmatpush1.bf16.msra.mxu0 %v1598
    %1736 = vmatprep.subr.bf16.mxu0 %v1601
    %1737 = vmatpush1.bf16.msra.mxu0 %v1600
    %1738 = vmatprep.mubr.bf16.mxu0 %v1020
    %1739 = vmatmul.mubr.bf16.gmra.mrb[0].mxu0 %v1019
    %v1740 = vpop.f32.mrb[0].mxu0
    %v1741 = vadd.f32 %v1373, %v1740
    %v1742 = vpop.f32.mrb[0].mxu0
    %v1743 = vadd.f32 %v1375, %v1742
    %v1744 = vpop.f32.mrb[0].mxu0
    %v1745 = vadd.f32 %v1377, %v1744
    %v1746 = vpop.f32.mrb[0].mxu0
    %v1747 = vadd.f32 %v1379, %v1746
    %1748 = vdwg.mxu0
    %1749 = vmatprep.subr.bf16.mxu0 %v1603
    %1750 = vmatpush1.bf16.msra.mxu0 %v1602
    %1751 = vmatprep.subr.bf16.mxu0 %v1605
    %1752 = vmatpush1.bf16.msra.mxu0 %v1604
    %1753 = vmatprep.subr.bf16.mxu0 %v1607
    %1754 = vmatpush1.bf16.msra.mxu0 %v1606
    %1755 = vmatprep.subr.bf16.mxu0 %v1609
    %1756 = vmatpush1.bf16.msra.mxu0 %v1608
    %1757 = vmatprep.subr.bf16.mxu0 %v1611
    %1758 = vmatpush1.bf16.msra.mxu0 %v1610
    %1759 = vmatprep.subr.bf16.mxu0 %v1613
    %1760 = vmatpush1.bf16.msra.mxu0 %v1612
    %1761 = vmatprep.subr.bf16.mxu0 %v1615
    %1762 = vmatpush1.bf16.msra.mxu0 %v1614
    %1763 = vmatprep.subr.bf16.mxu0 %v1617
    %1764 = vmatpush1.bf16.msra.mxu0 %v1616
    %1765 = vmatprep.subr.bf16.mxu0 %v1619
    %1766 = vmatpush1.bf16.msra.mxu0 %v1618
    %1767 = vmatprep.subr.bf16.mxu0 %v1621
    %1768 = vmatpush1.bf16.msra.mxu0 %v1620
    %1769 = vmatprep.subr.bf16.mxu0 %v1623
    %1770 = vmatpush1.bf16.msra.mxu0 %v1622
    %1771 = vmatprep.subr.bf16.mxu0 %v1625
    %1772 = vmatpush1.bf16.msra.mxu0 %v1624
    %1773 = vmatprep.subr.bf16.mxu0 %v1627
    %1774 = vmatpush1.bf16.msra.mxu0 %v1626
    %1775 = vmatprep.subr.bf16.mxu0 %v1629
    %1776 = vmatpush1.bf16.msra.mxu0 %v1628
    %1777 = vmatprep.subr.bf16.mxu0 %v1631
    %1778 = vmatpush1.bf16.msra.mxu0 %v1630
    %1779 = vmatprep.subr.bf16.mxu0 %v1704
    %1780 = vmatpush1.bf16.msra.mxu0 %v1701
    %1781 = vmatprep.mubr.bf16.mxu0 %v1698
    %1782 = vmatmul.mubr.bf16.gmra.mrb[0].mxu0 %v1021
    %v1783 = vpop.f32.mrb[0].mxu0
    %v1784 = vadd.f32 %v1741, %v1783
    %v1785 = vpop.f32.mrb[0].mxu0
    %v1786 = vadd.f32 %v1743, %v1785
    %v1787 = vpop.f32.mrb[0].mxu0
    %v1788 = vadd.f32 %v1745, %v1787
    %v1789 = vpop.f32.mrb[0].mxu0
    %v1790 = vadd.f32 %v1747, %v1789
    %1791 = vdwg.mxu0
    %v1792 = vld [vmem:[%s9] sm:$0xff]
    %v1793 = vld [vmem:[%s9 + $0x8] sm:$0xff]
    %v1794 = vld [vmem:[%s9 + $0x10] sm:$0xff]
    %v1795 = vld [vmem:[%s9 + $0x18] sm:$0xff]
    %v1796 = vld [vmem:[%s9 + $0x20] sm:$0xff]
    %v1797 = vld [vmem:[%s9 + $0x28] sm:$0xff]
    %v1798 = vld [vmem:[%s9 + $0x30] sm:$0xff]
    %v1799 = vld [vmem:[%s9 + $0x38] sm:$0xff]
    %v1800 = vld [vmem:[%s9 + $0x40] sm:$0xff]
    %v1801 = vld [vmem:[%s9 + $0x48] sm:$0xff]
    %v1802 = vld [vmem:[%s9 + $0x50] sm:$0xff]
    %v1803 = vld [vmem:[%s9 + $0x58] sm:$0xff]
    %v1804 = vld [vmem:[%s9 + $0x60] sm:$0xff]
    %v1805 = vld [vmem:[%s9 + $0x68] sm:$0xff]
    %v1806 = vld [vmem:[%s9 + $0x70] sm:$0xff]
    %v1807 = vld [vmem:[%s9 + $0x78] sm:$0xff]
    %v1808 = vld [vmem:[%s9 + $0x80] sm:$0xff]
    %v1809 = vld [vmem:[%s9 + $0x88] sm:$0xff]
    %v1810 = vld [vmem:[%s9 + $0x90] sm:$0xff]
    %v1811 = vld [vmem:[%s9 + $0x98] sm:$0xff]
    %v1812 = vld [vmem:[%s9 + $0xa0] sm:$0xff]
    %v1813 = vld [vmem:[%s9 + $0xa8] sm:$0xff]
    %v1814 = vld [vmem:[%s9 + $0xb0] sm:$0xff]
    %v1815 = vld [vmem:[%s9 + $0xb8] sm:$0xff]
    %v1816 = vld [vmem:[%s9 + $0xc0] sm:$0xff]
    %v1817 = vld [vmem:[%s9 + $0xc8] sm:$0xff]
    %v1818 = vld [vmem:[%s9 + $0xd0] sm:$0xff]
    %v1819 = vld [vmem:[%s9 + $0xd8] sm:$0xff]
    %v1820 = vld [vmem:[%s9 + $0xe0] sm:$0xff]
    %v1821 = vld [vmem:[%s9 + $0xe8] sm:$0xff]
    %v1822 = vld [vmem:[%s9 + $0xf0] sm:$0xff]
    %v1823 = vld [vmem:[%s9 + $0xf8] sm:$0xff]
    %v1824 = vld [vmem:[%s9 + $0x100] sm:$0xff]
    %v1825 = vld [vmem:[%s9 + $0x108] sm:$0xff]
    %v1826 = vld [vmem:[%s9 + $0x110] sm:$0xff]
    %v1827 = vld [vmem:[%s9 + $0x118] sm:$0xff]
    %v1828 = vld [vmem:[%s9 + $0x120] sm:$0xff]
    %v1829 = vld [vmem:[%s9 + $0x128] sm:$0xff]
    %v1830 = vld [vmem:[%s9 + $0x130] sm:$0xff]
    %v1831 = vld [vmem:[%s9 + $0x138] sm:$0xff]
    %v1832 = vld [vmem:[%s9 + $0x140] sm:$0xff]
    %v1833 = vld [vmem:[%s9 + $0x148] sm:$0xff]
    %v1834 = vld [vmem:[%s9 + $0x150] sm:$0xff]
    %v1835 = vld [vmem:[%s9 + $0x158] sm:$0xff]
    %v1836 = vld [vmem:[%s9 + $0x160] sm:$0xff]
    %v1837 = vld [vmem:[%s9 + $0x168] sm:$0xff]
    %v1838 = vld [vmem:[%s9 + $0x170] sm:$0xff]
    %v1839 = vld [vmem:[%s9 + $0x178] sm:$0xff]
    %v1840 = vld [vmem:[%s9 + $0x180] sm:$0xff]
    %v1841 = vld [vmem:[%s9 + $0x188] sm:$0xff]
    %v1842 = vld [vmem:[%s9 + $0x190] sm:$0xff]
    %v1843 = vld [vmem:[%s9 + $0x198] sm:$0xff]
    %v1844 = vld [vmem:[%s9 + $0x1a0] sm:$0xff]
    %v1845 = vld [vmem:[%s9 + $0x1a8] sm:$0xff]
    %v1846 = vld [vmem:[%s9 + $0x1b0] sm:$0xff]
    %v1847 = vld [vmem:[%s9 + $0x1b8] sm:$0xff]
    %v1848 = vld [vmem:[%s9 + $0x1c0] sm:$0xff]
    %v1849 = vld [vmem:[%s9 + $0x1c8] sm:$0xff]
    %v1850 = vld [vmem:[%s9 + $0x1d0] sm:$0xff]
    %v1851 = vld [vmem:[%s9 + $0x1d8] sm:$0xff]
    %v1852 = vld [vmem:[%s9 + $0x1e0] sm:$0xff]
    %v1853 = vld [vmem:[%s9 + $0x1e8] sm:$0xff]
    %v1854 = vld [vmem:[%s9 + $0x1f0] sm:$0x33]
    %v1918 = vunpack.c.l.b16 %v1792
    %v1919 = vunpack.c.h.b16 %v1792
    %v1920 = vunpack.c.l.b16 %v1793
    %v1921 = vunpack.c.h.b16 %v1793
    %v1922 = vunpack.c.l.b16 %v1794
    %v1923 = vunpack.c.h.b16 %v1794
    %v1924 = vunpack.c.l.b16 %v1795
    %v1925 = vunpack.c.h.b16 %v1795
    %v1926 = vunpack.c.l.b16 %v1796
    %v1927 = vunpack.c.h.b16 %v1796
    %v1928 = vunpack.c.l.b16 %v1797
    %v1929 = vunpack.c.h.b16 %v1797
    %v1930 = vunpack.c.l.b16 %v1798
    %v1931 = vunpack.c.h.b16 %v1798
    %v1932 = vunpack.c.l.b16 %v1799
    %v1933 = vunpack.c.h.b16 %v1799
    %v1934 = vunpack.c.l.b16 %v1800
    %v1935 = vunpack.c.h.b16 %v1800
    %v1936 = vunpack.c.l.b16 %v1801
    %v1937 = vunpack.c.h.b16 %v1801
    %v1938 = vunpack.c.l.b16 %v1802
    %v1939 = vunpack.c.h.b16 %v1802
    %v1940 = vunpack.c.l.b16 %v1803
    %v1941 = vunpack.c.h.b16 %v1803
    %v1942 = vunpack.c.l.b16 %v1804
    %v1943 = vunpack.c.h.b16 %v1804
    %v1944 = vunpack.c.l.b16 %v1805
    %v1945 = vunpack.c.h.b16 %v1805
    %v1946 = vunpack.c.l.b16 %v1806
    %v1947 = vunpack.c.h.b16 %v1806
    %v1948 = vunpack.c.l.b16 %v1807
    %v1949 = vunpack.c.h.b16 %v1807
    %v1950 = vunpack.c.l.b16 %v1808
    %v1951 = vunpack.c.h.b16 %v1808
    %v1952 = vunpack.c.l.b16 %v1809
    %v1953 = vunpack.c.h.b16 %v1809
    %v1954 = vunpack.c.l.b16 %v1810
    %v1955 = vunpack.c.h.b16 %v1810
    %v1956 = vunpack.c.l.b16 %v1811
    %v1957 = vunpack.c.h.b16 %v1811
    %v1958 = vunpack.c.l.b16 %v1812
    %v1959 = vunpack.c.h.b16 %v1812
    %v1960 = vunpack.c.l.b16 %v1813
    %v1961 = vunpack.c.h.b16 %v1813
    %v1962 = vunpack.c.l.b16 %v1814
    %v1963 = vunpack.c.h.b16 %v1814
    %v1964 = vunpack.c.l.b16 %v1815
    %v1965 = vunpack.c.h.b16 %v1815
    %v1966 = vunpack.c.l.b16 %v1816
    %v1967 = vunpack.c.h.b16 %v1816
    %v1968 = vunpack.c.l.b16 %v1817
    %v1969 = vunpack.c.h.b16 %v1817
    %v1970 = vunpack.c.l.b16 %v1818
    %v1971 = vunpack.c.h.b16 %v1818
    %v1972 = vunpack.c.l.b16 %v1819
    %v1973 = vunpack.c.h.b16 %v1819
    %v1974 = vunpack.c.l.b16 %v1820
    %v1975 = vunpack.c.h.b16 %v1820
    %v1976 = vunpack.c.l.b16 %v1821
    %v1977 = vunpack.c.h.b16 %v1821
    %v1978 = vunpack.c.l.b16 %v1822
    %v1979 = vunpack.c.h.b16 %v1822
    %v1980 = vunpack.c.l.b16 %v1823
    %v1981 = vunpack.c.h.b16 %v1823
    %v1982 = vunpack.c.l.b16 %v1824
    %v1983 = vunpack.c.h.b16 %v1824
    %v1984 = vunpack.c.l.b16 %v1825
    %v1985 = vunpack.c.h.b16 %v1825
    %v1986 = vunpack.c.l.b16 %v1826
    %v1987 = vunpack.c.h.b16 %v1826
    %v1988 = vunpack.c.l.b16 %v1827
    %v1989 = vunpack.c.h.b16 %v1827
    %v1990 = vunpack.c.l.b16 %v1828
    %v1991 = vunpack.c.h.b16 %v1828
    %v1992 = vunpack.c.l.b16 %v1829
    %v1993 = vunpack.c.h.b16 %v1829
    %v1994 = vunpack.c.l.b16 %v1830
    %v1995 = vunpack.c.h.b16 %v1830
    %v1996 = vunpack.c.l.b16 %v1831
    %v1997 = vunpack.c.h.b16 %v1831
    %v1998 = vunpack.c.l.b16 %v1832
    %v1999 = vunpack.c.h.b16 %v1832
    %v2000 = vunpack.c.l.b16 %v1833
    %v2001 = vunpack.c.h.b16 %v1833
    %v2002 = vunpack.c.l.b16 %v1834
    %v2003 = vunpack.c.h.b16 %v1834
    %v2004 = vunpack.c.l.b16 %v1835
    %v2005 = vunpack.c.h.b16 %v1835
    %v2006 = vunpack.c.l.b16 %v1836
    %v2007 = vunpack.c.h.b16 %v1836
    %v2008 = vunpack.c.l.b16 %v1837
    %v2009 = vunpack.c.h.b16 %v1837
    %v2010 = vunpack.c.l.b16 %v1838
    %v2011 = vunpack.c.h.b16 %v1838
    %v2012 = vunpack.c.l.b16 %v1839
    %v2013 = vunpack.c.h.b16 %v1839
    %v2014 = vunpack.c.l.b16 %v1840
    %v2015 = vunpack.c.h.b16 %v1840
    %v2016 = vunpack.c.l.b16 %v1841
    %v2017 = vunpack.c.h.b16 %v1841
    %v2018 = vunpack.c.l.b16 %v1842
    %v2019 = vunpack.c.h.b16 %v1842
    %v2020 = vunpack.c.l.b16 %v1843
    %v2021 = vunpack.c.h.b16 %v1843
    %v2022 = vunpack.c.l.b16 %v1844
    %v2023 = vunpack.c.h.b16 %v1844
    %v2024 = vunpack.c.l.b16 %v1845
    %v2025 = vunpack.c.h.b16 %v1845
    %v2026 = vunpack.c.l.b16 %v1846
    %v2027 = vunpack.c.h.b16 %v1846
    %v2028 = vunpack.c.l.b16 %v1847
    %v2029 = vunpack.c.h.b16 %v1847
    %v2030 = vunpack.c.l.b16 %v1848
    %v2031 = vunpack.c.h.b16 %v1848
    %v2032 = vunpack.c.l.b16 %v1849
    %v2033 = vunpack.c.h.b16 %v1849
    %v2034 = vunpack.c.l.b16 %v1850
    %v2035 = vunpack.c.h.b16 %v1850
    %v2036 = vunpack.c.l.b16 %v1851
    %v2037 = vunpack.c.h.b16 %v1851
    %v2038 = vunpack.c.l.b16 %v1852
    %v2039 = vunpack.c.h.b16 %v1852
    %v2040 = vunpack.c.l.b16 %v1853
    %v2041 = vunpack.c.h.b16 %v1853
    %v2042 = vunpack.c.l.b16 %v1854
    %v2043 = vunpack.c.h.b16 %v1854
    %v2044 = vpack.c.b16 %v1920, %v1918
    %v2045 = vpack.c.b16 %v1921, %v1919
    %v2046 = vpack.c.b16 %v1924, %v1922
    %v2047 = vpack.c.b16 %v1925, %v1923
    %v2048 = vpack.c.b16 %v1928, %v1926
    %v2049 = vpack.c.b16 %v1929, %v1927
    %v2050 = vpack.c.b16 %v1932, %v1930
    %v2051 = vpack.c.b16 %v1933, %v1931
    %v2052 = vpack.c.b16 %v1936, %v1934
    %v2053 = vpack.c.b16 %v1937, %v1935
    %v2054 = vpack.c.b16 %v1940, %v1938
    %v2055 = vpack.c.b16 %v1941, %v1939
    %v2056 = vpack.c.b16 %v1944, %v1942
    %v2057 = vpack.c.b16 %v1945, %v1943
    %v2058 = vpack.c.b16 %v1948, %v1946
    %v2059 = vpack.c.b16 %v1949, %v1947
    %v2060 = vpack.c.b16 %v1952, %v1950
    %v2061 = vpack.c.b16 %v1953, %v1951
    %v2062 = vpack.c.b16 %v1956, %v1954
    %v2063 = vpack.c.b16 %v1957, %v1955
    %v2064 = vpack.c.b16 %v1960, %v1958
    %v2065 = vpack.c.b16 %v1961, %v1959
    %v2066 = vpack.c.b16 %v1964, %v1962
    %v2067 = vpack.c.b16 %v1965, %v1963
    %v2068 = vpack.c.b16 %v1968, %v1966
    %v2069 = vpack.c.b16 %v1969, %v1967
    %v2070 = vpack.c.b16 %v1972, %v1970
    %v2071 = vpack.c.b16 %v1973, %v1971
    %v2072 = vpack.c.b16 %v1976, %v1974
    %v2073 = vpack.c.b16 %v1977, %v1975
    %v2074 = vpack.c.b16 %v1980, %v1978
    %v2075 = vpack.c.b16 %v1981, %v1979
    %v2076 = vpack.c.b16 %v1984, %v1982
    %v2077 = vpack.c.b16 %v1985, %v1983
    %v2078 = vpack.c.b16 %v1988, %v1986
    %v2079 = vpack.c.b16 %v1989, %v1987
    %v2080 = vpack.c.b16 %v1992, %v1990
    %v2081 = vpack.c.b16 %v1993, %v1991
    %v2082 = vpack.c.b16 %v1996, %v1994
    %v2083 = vpack.c.b16 %v1997, %v1995
    %v2084 = vpack.c.b16 %v2000, %v1998
    %v2085 = vpack.c.b16 %v2001, %v1999
    %v2086 = vpack.c.b16 %v2004, %v2002
    %v2087 = vpack.c.b16 %v2005, %v2003
    %v2088 = vpack.c.b16 %v2008, %v2006
    %v2089 = vpack.c.b16 %v2009, %v2007
    %v2090 = vpack.c.b16 %v2012, %v2010
    %v2091 = vpack.c.b16 %v2013, %v2011
    %v2092 = vpack.c.b16 %v2016, %v2014
    %v2093 = vpack.c.b16 %v2017, %v2015
    %v2094 = vpack.c.b16 %v2020, %v2018
    %v2095 = vpack.c.b16 %v2021, %v2019
    %v2096 = vpack.c.b16 %v2024, %v2022
    %v2097 = vpack.c.b16 %v2025, %v2023
    %v2098 = vpack.c.b16 %v2028, %v2026
    %v2099 = vpack.c.b16 %v2029, %v2027
    %v2100 = vpack.c.b16 %v2032, %v2030
    %v2101 = vpack.c.b16 %v2033, %v2031
    %v2102 = vpack.c.b16 %v2036, %v2034
    %v2103 = vpack.c.b16 %v2037, %v2035
    %v2104 = vpack.c.b16 %v2040, %v2038
    %v2105 = vpack.c.b16 %v2041, %v2039
    %v2106 = vpack.c.b16 %v2042, %v2042
    %v2107 = vpack.c.b16 %v2043, %v2043
    %v2171 = vsel %vm1696, %v1026, 0
    %v2174 = vsel %vm62, %v2106, 0
    %v2177 = vsel %vm62, %v2107, 0
    %2179 = vmatprep.subr.bf16.mxu0 %v2045
    %2180 = vmatpush1.bf16.msra.mxu0 %v2044
    %2181 = vmatprep.subr.bf16.mxu0 %v2047
    %2182 = vmatpush1.bf16.msra.mxu0 %v2046
    %2183 = vmatprep.subr.bf16.mxu0 %v2049
    %2184 = vmatpush1.bf16.msra.mxu0 %v2048
    %2185 = vmatprep.subr.bf16.mxu0 %v2051
    %2186 = vmatpush1.bf16.msra.mxu0 %v2050
    %2187 = vmatprep.subr.bf16.mxu0 %v2053
    %2188 = vmatpush1.bf16.msra.mxu0 %v2052
    %2189 = vmatprep.subr.bf16.mxu0 %v2055
    %2190 = vmatpush1.bf16.msra.mxu0 %v2054
    %2191 = vmatprep.subr.bf16.mxu0 %v2057
    %2192 = vmatpush1.bf16.msra.mxu0 %v2056
    %2193 = vmatprep.subr.bf16.mxu0 %v2059
    %2194 = vmatpush1.bf16.msra.mxu0 %v2058
    %2195 = vmatprep.subr.bf16.mxu0 %v2061
    %2196 = vmatpush1.bf16.msra.mxu0 %v2060
    %2197 = vmatprep.subr.bf16.mxu0 %v2063
    %2198 = vmatpush1.bf16.msra.mxu0 %v2062
    %2199 = vmatprep.subr.bf16.mxu0 %v2065
    %2200 = vmatpush1.bf16.msra.mxu0 %v2064
    %2201 = vmatprep.subr.bf16.mxu0 %v2067
    %2202 = vmatpush1.bf16.msra.mxu0 %v2066
    %2203 = vmatprep.subr.bf16.mxu0 %v2069
    %2204 = vmatpush1.bf16.msra.mxu0 %v2068
    %2205 = vmatprep.subr.bf16.mxu0 %v2071
    %2206 = vmatpush1.bf16.msra.mxu0 %v2070
    %2207 = vmatprep.subr.bf16.mxu0 %v2073
    %2208 = vmatpush1.bf16.msra.mxu0 %v2072
    %2209 = vmatprep.subr.bf16.mxu0 %v2075
    %2210 = vmatpush1.bf16.msra.mxu0 %v2074
    %2211 = vmatprep.mubr.bf16.mxu0 %v1024
    %2212 = vmatmul.mubr.bf16.gmra.mrb[0].mxu0 %v1023
    %v2213 = vpop.f32.mrb[0].mxu0
    %v2214 = vadd.f32 0.0, %v2213
    %v2215 = vpop.f32.mrb[0].mxu0
    %v2216 = vadd.f32 0.0, %v2215
    %v2217 = vpop.f32.mrb[0].mxu0
    %v2218 = vadd.f32 0.0, %v2217
    %v2219 = vpop.f32.mrb[0].mxu0
    %v2220 = vadd.f32 0.0, %v2219
    %2221 = vdwg.mxu0
    %2222 = vmatprep.subr.bf16.mxu0 %v2077
    %2223 = vmatpush1.bf16.msra.mxu0 %v2076
    %2224 = vmatprep.subr.bf16.mxu0 %v2079
    %2225 = vmatpush1.bf16.msra.mxu0 %v2078
    %2226 = vmatprep.subr.bf16.mxu0 %v2081
    %2227 = vmatpush1.bf16.msra.mxu0 %v2080
    %2228 = vmatprep.subr.bf16.mxu0 %v2083
    %2229 = vmatpush1.bf16.msra.mxu0 %v2082
    %2230 = vmatprep.subr.bf16.mxu0 %v2085
    %2231 = vmatpush1.bf16.msra.mxu0 %v2084
    %2232 = vmatprep.subr.bf16.mxu0 %v2087
    %2233 = vmatpush1.bf16.msra.mxu0 %v2086
    %2234 = vmatprep.subr.bf16.mxu0 %v2089
    %2235 = vmatpush1.bf16.msra.mxu0 %v2088
    %2236 = vmatprep.subr.bf16.mxu0 %v2091
    %2237 = vmatpush1.bf16.msra.mxu0 %v2090
    %2238 = vmatprep.subr.bf16.mxu0 %v2093
    %2239 = vmatpush1.bf16.msra.mxu0 %v2092
    %2240 = vmatprep.subr.bf16.mxu0 %v2095
    %2241 = vmatpush1.bf16.msra.mxu0 %v2094
    %2242 = vmatprep.subr.bf16.mxu0 %v2097
    %2243 = vmatpush1.bf16.msra.mxu0 %v2096
    %2244 = vmatprep.subr.bf16.mxu0 %v2099
    %2245 = vmatpush1.bf16.msra.mxu0 %v2098
    %2246 = vmatprep.subr.bf16.mxu0 %v2101
    %2247 = vmatpush1.bf16.msra.mxu0 %v2100
    %2248 = vmatprep.subr.bf16.mxu0 %v2103
    %2249 = vmatpush1.bf16.msra.mxu0 %v2102
    %2250 = vmatprep.subr.bf16.mxu0 %v2105
    %2251 = vmatpush1.bf16.msra.mxu0 %v2104
    %2252 = vmatprep.subr.bf16.mxu0 %v2177
    %2253 = vmatpush1.bf16.msra.mxu0 %v2174
    %2254 = vmatprep.mubr.bf16.mxu0 %v2171
    %2255 = vmatmul.mubr.bf16.gmra.mrb[0].mxu0 %v1025
    %v2256 = vpop.f32.mrb[0].mxu0
    %v2257 = vadd.f32 %v2214, %v2256
    %v2258 = vpop.f32.mrb[0].mxu0
    %v2259 = vadd.f32 %v2216, %v2258
    %v2260 = vpop.f32.mrb[0].mxu0
    %v2261 = vadd.f32 %v2218, %v2260
    %v2262 = vpop.f32.mrb[0].mxu0
    %v2263 = vadd.f32 %v2220, %v2262
    %2264 = vdwg.mxu0
    %v2265 = vadd.f32 %v1784, %v2257
    %v2266 = vadd.f32 %v1786, %v2259
    %v2267 = vadd.f32 %v1788, %v2261
    %v2268 = vadd.f32 %v1790, %v2263
    %2271 = vrot.lane.b32.xlu0 %v2265, 80
    %v2272 = vpop.permute.xlu0 %2271
    %2273 = vrot.lane.b32.xlu0 %v2267, 80
    %v2274 = vpop.permute.xlu0 %2273
    %v2277 = vrot.slane %v2272, 1
    %v2278 = vrot.slane %v2274, 1
    %v2279 = vlaneseq
    %v2280 = vshrl.u32 %v2279, 7
    %vm2281 = vcmp.lt.s32.totalorder %v2280, 7
    %v2282 = vsel %vm2281, %v2277, %v2278
    %v2283 = vsel %vm2281, %v2278, %v2277
    %v2284 = vadd.f32 %v2265, %v2282
    %v2285 = vadd.f32 %v2267, %v2283
    %2288 = vrot.lane.b32.xlu0 %v2265, 32
    %v2289 = vpop.permute.xlu0 %2288
    %2290 = vrot.lane.b32.xlu0 %v2266, 32
    %v2291 = vpop.permute.xlu0 %2290
    %2292 = vrot.lane.b32.xlu0 %v2267, 32
    %v2293 = vpop.permute.xlu0 %2292
    %2294 = vrot.lane.b32.xlu0 %v2268, 32
    %v2295 = vpop.permute.xlu0 %2294
    %vm2296 = vcmask 261120
    %v2297 = vsel %vm2296, %v2289, %v2291
    %v2298 = vsel %vm2296, %v2293, %v2295
    %v2301 = vrot.slane %v2297, 2
    %v2302 = vrot.slane %v2298, 2
    %vm2303 = vcmp.lt.s32.totalorder %v2280, 6
    %v2304 = vsel %vm2303, %v2301, %v2302
    %v2305 = vsel %vm2303, %v2302, %v2301
    %v2306 = vadd.f32 %v2284, %v2304
    %v2307 = vadd.f32 %v2285, %v2305
    %2308 = vrot.lane.b32.xlu0 %v2266, 112
    %v2309 = vpop.permute.xlu0 %2308
    %2310 = vrot.lane.b32.xlu0 %v2268, 112
    %v2311 = vpop.permute.xlu0 %2310
    %v2314 = vrot.slane %v2309, 3
    %v2315 = vrot.slane %v2311, 3
    %vm2316 = vcmp.lt.s32.totalorder %v2280, 5
    %v2317 = vsel %vm2316, %v2314, %v2315
    %v2318 = vsel %vm2316, %v2315, %v2314
    %v2319 = vadd.f32 %v2306, %v2317
    %v2320 = vadd.f32 %v2307, %v2318
    %v2321 = vmax.f32 %v2319, 0.0
    %v2322 = vmax.f32 %v2320, 0.0
    %v2323 = vlaneseq
    %v2324 = vand.u32 %v2323, 127
    %vm2325 = vcmp.lt.s32.totalorder %v2324, 16
    %vm2326 = vcmp.lt.s32.totalorder %v2324, 32
    %v2327 = vsel %vm2326, 3, 4
    %v2328 = vsel %vm2325, 2, %v2327
    %v2329 = vsub.s32 8, %v2328
    %vm2330 = vcmp.le.s32.totalorder %v2280, %v2329
    %v2331 = vsel %vm2330, %v2321, 0.0
    %v2332 = vsel %vm2330, %v2322, 0.0
    %vm2333 = vcmask 392192
    %v2334 = vsel %vm2333, %v2331, -inf
    %v2335 = vrot.slane %v2334, 4
    %v2336 = vmax.f32 %v2334, %v2335
    %v2337 = vrot.slane %v2336, 2
    %v2338 = vmax.f32 %v2336, %v2337
    %v2339 = vrot.slane %v2338, 1
    %v2340 = vmax.f32 %v2338, %v2339
    %v2341 = vsel %vm2333, %v2332, -inf
    %v2342 = vrot.slane %v2341, 4
    %v2343 = vmax.f32 %v2341, %v2342
    %v2344 = vrot.slane %v2343, 2
    %v2345 = vmax.f32 %v2343, %v2344
    %v2346 = vrot.slane %v2345, 1
    %v2347 = vmax.f32 %v2345, %v2346
    %v2348 = vpack.c.bf16 %v2340, %v2340
    %v2349 = vpack.c.bf16 %v2347, %v2347
    %v2350 = vld [vmem:[%s10] sm:$0xf]
    %v2351 = vld [vmem:[%s10 + $0x4] sm:$0xf]
    %v2352 = vld [vmem:[%s10 + $0x8] sm:$0xf]
    %v2353 = vld [vmem:[%s10 + $0xc] sm:$0xf]
    %v2354 = vld [vmem:[%s10 + $0x10] sm:$0xf]
    %v2355 = vld [vmem:[%s10 + $0x14] sm:$0xf]
    %v2358 = vunpack.c.l.b16 %v2348
    %v2359 = vunpack.c.l.b16 %v2349
    %vm2360 = vcmask 1041409
    %v2361 = vsel %vm2360, %v2359, %v2358
    %v2362 = vpack.c.b16 %v2361, %v2361
    %v2369 = vunpack.c.l.b16 %v2350
    %v2370 = vunpack.c.l.b16 %v2351
    %v2371 = vunpack.c.l.b16 %v2352
    %v2372 = vunpack.c.l.b16 %v2353
    %v2373 = vunpack.c.l.b16 %v2354
    %v2374 = vunpack.c.l.b16 %v2355
    %v2375 = vpack.c.b16 %v2370, %v2369
    %v2376 = vpack.c.b16 %v2372, %v2371
    %v2377 = vpack.c.b16 %v2374, %v2373
    %v2382 = vsel %vm2333, %v2362, 0
    %2384 = vmatprep.subr.bf16.mxu0 0
    %2385 = vmatpush1.bf16.msra.mxu0 %v2375
    %2386 = vmatprep.subr.bf16.mxu0 0
    %2387 = vmatpush1.bf16.msra.mxu0 %v2376
    %2388 = vmatprep.subr.bf16.mxu0 0
    %2389 = vmatpush1.bf16.msra.mxu0 %v2377
    %2390 = vmatprep.subr.bf16.mxu0 0
    %2391 = vmatpush1.bf16.msra.mxu0 0
    %2392 = vmatprep.subr.bf16.mxu0 0
    %2393 = vmatpush1.bf16.msra.mxu0 0
    %2394 = vmatprep.subr.bf16.mxu0 0
    %2395 = vmatpush1.bf16.msra.mxu0 0
    %2396 = vmatprep.subr.bf16.mxu0 0
    %2397 = vmatpush1.bf16.msra.mxu0 0
    %2398 = vmatprep.subr.bf16.mxu0 0
    %2399 = vmatpush1.bf16.msra.mxu0 0
    %2400 = vmatprep.subr.bf16.mxu0 0
    %2401 = vmatpush1.bf16.msra.mxu0 0
    %2402 = vmatprep.subr.bf16.mxu0 0
    %2403 = vmatpush1.bf16.msra.mxu0 0
    %2404 = vmatprep.subr.bf16.mxu0 0
    %2405 = vmatpush1.bf16.msra.mxu0 0
    %2406 = vmatprep.subr.bf16.mxu0 0
    %2407 = vmatpush1.bf16.msra.mxu0 0
    %2408 = vmatprep.subr.bf16.mxu0 0
    %2409 = vmatpush1.bf16.msra.mxu0 0
    %2410 = vmatprep.subr.bf16.mxu0 0
    %2411 = vmatpush1.bf16.msra.mxu0 0
    %2412 = vmatprep.subr.bf16.mxu0 0
    %2413 = vmatpush1.bf16.msra.mxu0 0
    %2414 = vmatprep.subr.bf16.mxu0 0
    %2415 = vmatpush1.bf16.msra.mxu0 0
    %2416 = vmatprep.mubr.bf16.mxu0 0
    %2417 = vmatmul.mubr.bf16.gmra.mrb[0].mxu0 %v2382
    %v2418 = vpop.f32.mrb[0].mxu0
    %v2419 = vadd.f32 0.0, %v2418
    %v2420 = vpop.f32.mrb[0].mxu0
    %v2421 = vpop.f32.mrb[0].mxu0
    %v2422 = vpop.f32.mrb[0].mxu0
    %2423 = vdwg.mxu0
    %vm2424 = vcmask 9216
    %v2425 = vsel %vm2424, %v2419, -inf
    %2426 = vmax.xlane.f32.xlu0 %v2425
    %v2427 = vpop.xlane.xlu0 %2426
    %v2428 = vsub.f32 %v2419, %v2427
    %v2429 = vmul.f32 %v2428, 1.442695
    %v2430 = vpow.pop %v2429
    %v2431 = vsel %vm2424, %v2430, 0.0
    %2432 = vadd.xlane.f32.xlu0 %v2431
    %v2433 = vpop.xlane.xlu0 %2432
    %v2434 = vrcp.pop %v2433
    %v2435 = vmul.f32 %v2430, %v2434
    %2436 = vst.msk [vmem:[#allocation2] sm:$0x3] %vm2424, %v2435
    // Predicated region
    $region46: #{run_model.1} parent=1 // pred_check
      _
    $region47: #{run_model.1} parent=1 // pred_check_branch
      %2438 = sbr.rel (0) target = $region49
    $region48: #{run_model.1} parent=1 // pred_region
      %s2440 = ssub.s32 32, 32
      %2441 = vsyncadd [#allocation3], %s2440
      %s2443 = sshll.u32 [#allocation2], 4
      %s2444 = int_to_ptr.vmem [resolvable:$true] %s2443
      %2446 = dma.vmem_to_hbm [thread:$0]  %s2444, 32, %s11, [#allocation3]
    $region49: #{run_model.1} parent=1 // pred_fallthru
      _
    // Predicated region
    $region50: #{run_model.1} parent=1 // pred_check
      _
    $region51: #{run_model.1} parent=1 // pred_check_branch
      %2448 = sbr.rel (0) target = $region53
    $region52: #{run_model.1} parent=1 // pred_region
      %2449 = dma.done [#allocation3], 32
    $region53: #{run_model.1} parent=1 // pred_fallthru
      _
    %2450 = vsyncpa [#allocation3], 1

</llo_original>
